<compile_context>
chip_gen: v7x
topology: tpu7x:2x2x1
jax: 0.10.0
libtpu: 0.0.40
codegen_flags: <defaults>
</compile_context>

<pallas_src>
import functools

import jax
import jax.numpy as jnp
from jax.experimental import pallas as pl
from jax.experimental.pallas import tpu as pltpu


# ------------------------------------------------------------------- kernel --

def _face_dfa_kernel(x_ref, shift_ref, wf_ref, bc_ref, wh_ref, bh_ref,
                     masks_ref, pb_ref, plc_ref, plsv_ref, o_ref, *, H, W, A):
    """Per-batch fused forward, channel-major.  M = H*W on the lane axis.

      x_ref     (C, M)      raw RGB image, (h, w) flattened on lanes
      shift_ref (C, 1)      per-channel raw value that normalizes to 0
      wf_ref    (Cf, Kpad)  folded conv weights (normalize + BGR flip), bf16
      bc_ref    (Cf, 1)     conv bias
      wh_ref    (16A, Cf)   head weights, rows permuted to packed anchor order
      bh_ref    (16A, 1)    head bias (same permutation)
      masks_ref (9, M)      0/1 zero-pad border masks per conv tap (dy, dx)
      pb_ref    (4A, M)     per-anchor prior rows [pcx, pcy, pw, ph]
      plc_ref   (10A, M)    per-anchor landmark prior centers [pcx, pcy] * 5
      plsv_ref  (10A, M)    per-anchor landmark prior scales  [pw, ph] * 5 * 0.1
      o_ref     (16A, M)    packed rows [score, x0, y0, x1, y1, lm0..9, pad]
    """
    M = H * W
    V0, V1 = 0.1, 0.2

    # ((x-0.5)/0.5 - mean)/std and the RGB->BGR flip are folded into wf; here
    # only the raw shift that normalizes to 0 is subtracted, so the masked
    # zero border below matches zero padding of the normalized image.
    xs = x_ref[...] - shift_ref[...]                              # (C, M)
    C = xs.shape[0]

    # im2col, channel-major: 9 static lane shifts + border masks (no pad
    # scratch, no full-image memset).  Wrapped values are masked to zero.
    pieces = []
    for dy in range(3):
        for dx in range(3):
            off = (dy - 1) * W + (dx - 1)
            if off == 0:
                sh = xs
            else:
                # sh[:, j] = xs[:, j + off]   (mod M; wraps are masked)
                sh = jnp.concatenate([xs[:, off:], xs[:, :off]], axis=1)
            k = 3 * dy + dx
            pieces.append(sh * masks_ref[k:k + 1, :])
    extra = wf_ref.shape[1] - 9 * C                               # pad K to 32
    if extra > 0:
        pieces.append(jnp.zeros((extra, M), jnp.float32))
    patchesT = jnp.concatenate(pieces, axis=0).astype(jnp.bfloat16)  # (Kpad, M)

    # 3x3 conv (+bias, ReLU) as one MXU matmul; bf16 operands, f32 accumulate.
    featT = jnp.maximum(
        jnp.dot(wf_ref[...], patchesT, preferred_element_type=jnp.float32)
        + bc_ref[...], 0.0)                                       # (Cf, M)

    # Fused 1x1 anchor heads; rows already in packed per-anchor order.
    headT = (jnp.dot(wh_ref[...], featT.astype(jnp.bfloat16),
                     preferred_element_type=jnp.float32)
             + bh_ref[...])                                       # (16A, M)

    # SSD decode: every row lane-dense on M, direct row-slice stores, f32 math.
    for a in range(A):
        r = 16 * a
        slab = headT[r:r + 16, :]        # [cls0, cls1, loc0..3, ldmk0..9]

        # face score = softmax(cls)[:, 1] = sigmoid(cls1 - cls0)   (exact)
        o_ref[r + 0:r + 1, :] = 1.0 / (1.0 + jnp.exp(slab[0:1, :] - slab[1:2, :]))

        # bbox decode -> corner form -> clamp [0, 1]
        cxy = pb_ref[4 * a:4 * a + 2, :]                          # [pcx; pcy]
        pwh = pb_ref[4 * a + 2:4 * a + 4, :]                      # [pw;  ph ]
        ctr = cxy + slab[2:4, :] * (V0 * pwh)
        sz = pwh * jnp.exp(slab[4:6, :] * V1)
        o_ref[r + 1:r + 3, :] = jnp.clip(ctr - 0.5 * sz, 0.0, 1.0)   # x0, y0
        o_ref[r + 3:r + 5, :] = jnp.clip(ctr + 0.5 * sz, 0.0, 1.0)   # x1, y1

        # landmark decode: one fused multiply-add over 10 rows.
        o_ref[r + 5:r + 15, :] = (plc_ref[10 * a:10 * a + 10, :]
                                  + slab[6:16, :] * plsv_ref[10 * a:10 * a + 10, :])

        o_ref[r + 15:r + 16, :] = jnp.zeros((1, M), jnp.float32)     # pad row


# ------------------------------------------------------------------ wrapper --

def make_params(C_in=3, C_feat=32, A=2):
    k1, k2, k3, k4 = jax.random.split(jax.random.PRNGKey(42), 4)
    out_c = A * (4 + 2 + 10)
    return dict(
        mean=jnp.array([0.1, 0.2, 0.3], jnp.float32)[:C_in],
        std=jnp.array([0.5, 0.6, 0.7], jnp.float32)[:C_in],
        w_conv=0.1 * jax.random.normal(k1, (3, 3, C_in, C_feat), jnp.float32),
        b_conv=0.01 * jax.random.normal(k2, (1, C_feat), jnp.float32),
        w_head=0.1 * jax.random.normal(k3, (C_feat, out_c), jnp.float32),
        b_head=0.01 * jax.random.normal(k4, (1, out_c), jnp.float32),
    )


def make_prior_box(H, W, A=2, sizes=(0.1, 0.2)):
    ys, xs = jnp.meshgrid(jnp.arange(H, dtype=jnp.float32),
                          jnp.arange(W, dtype=jnp.float32), indexing="ij")
    cx = (xs + 0.5) / W
    cy = (ys + 0.5) / H
    anchors = [jnp.stack([cx, cy, jnp.full_like(cx, s), jnp.full_like(cx, s)],
                         axis=-1) for s in sizes[:A]]
    pri = jnp.stack(anchors, axis=2)              # (H, W, A, 4)
    return pri.reshape(H * W * A, 4)


def face_kp_predictor(unnorm_images_rgb, params, prior_box, A=2):
    """unnorm_images_rgb: NCHW float32 in [0, 1], like the PyTorch module."""
    B, C, H, W = unnorm_images_rgb.shape
    HW = H * W
    C_feat = params["w_conv"].shape[3]
    V0 = 0.1

    # Channel-major image: NCHW -> (B, C, H*W) is a free row-major reshape.
    x = unnorm_images_rgb.reshape(B, C, HW).astype(jnp.float32)

    # Fold ((x-0.5)/0.5 - mean)/std and the RGB->BGR flip into the conv:
    #   wf[dy,dx,c,:] = w_conv[dy,dx,C-1-c,:] * (2/std[c])  (c in RGB order)
    #   shift[c] = (1+mean[c])/2 normalizes to 0, so the masked zero border of
    #   (x - shift) matches zero padding of the normalized image; conv bias
    #   is unchanged.
    s = (2.0 / params["std"]).reshape(1, 1, C, 1)
    wf = params["w_conv"][:, :, ::-1, :] * s                      # (3,3,C,Cf)
    wf_flat = wf.reshape(9 * C, C_feat)
    k_pad = ((9 * C + 15) // 16) * 16                             # aligned K
    if k_pad > 9 * C:
        wf_flat = jnp.concatenate(
            [wf_flat, jnp.zeros((k_pad - 9 * C, C_feat), jnp.float32)], axis=0)
    wf_t = wf_flat.T.astype(jnp.bfloat16)                         # (Cf, Kpad)
    shift = ((1.0 + params["mean"]) / 2.0).reshape(C, 1)
    b_conv = params["b_conv"].reshape(C_feat, 1)

    # Permute head channels so each anchor owns contiguous rows in packed
    # output order [cls0, cls1, loc0..3, ldmk0..9].
    perm = []
    for a in range(A):
        perm += [4 * A + 2 * a, 4 * A + 2 * a + 1]
        perm += [4 * a + j for j in range(4)]
        perm += [6 * A + 10 * a + j for j in range(10)]
    perm = jnp.asarray(perm, jnp.int32)
    wh_t = params["w_head"].T[perm, :].astype(jnp.bfloat16)       # (16A, Cf)
    bh_t = params["b_head"].reshape(-1)[perm].reshape(16 * A, 1)

    # Static priors, anchor-major / channel-major; landmark variance folded in.
    pri_t = prior_box.reshape(HW, A, 4).transpose(1, 2, 0)        # (A, 4, HW)
    pb = pri_t.reshape(4 * A, HW)
    plc = jnp.tile(pri_t[:, 0:2, :], (1, 5, 1)).reshape(10 * A, HW)
    plsv = (V0 * jnp.tile(pri_t[:, 2:4, :], (1, 5, 1))).reshape(10 * A, HW)

    # 0/1 zero-pad border masks for the 9 conv taps over the flattened lanes.
    pix = jnp.arange(HW, dtype=jnp.int32)
    hh, ww = pix // W, pix % W
    dy_ok = [hh >= 1, jnp.ones((HW,), dtype=jnp.bool_), hh <= H - 2]
    dx_ok = [ww >= 1, jnp.ones((HW,), dtype=jnp.bool_), ww <= W - 2]
    masks = jnp.stack([(dy_ok[dy] & dx_ok[dx]).astype(jnp.float32)
                       for dy in range(3) for dx in range(3)], axis=0)  # (9,HW)

    def _bcast(shape):
        zeros = (0,) * len(shape)
        return pl.BlockSpec(shape, lambda b: zeros)

    kernel = functools.partial(_face_dfa_kernel, H=H, W=W, A=A)
    # Grid over batch ("parallel": both TensorCores on v7x; no-op on v5e/v6e).
    # TODO(synk): at production resolutions, add a second grid axis that
    # strip-tiles H, size strips for 64 MiB VMEM on v7x, and set
    # vmem_limit_bytes via pltpu.CompilerParams.
    packed_t = pl.pallas_call(
        kernel,
        out_shape=jax.ShapeDtypeStruct((16 * A, B * HW), jnp.float32),
        grid=(B,),
        in_specs=[
            pl.BlockSpec((None, C, HW), lambda b: (b, 0, 0)),
            _bcast((C, 1)),
            _bcast((C_feat, k_pad)),
            _bcast((C_feat, 1)),
            _bcast((16 * A, C_feat)),
            _bcast((16 * A, 1)),
            _bcast((9, HW)),
            _bcast((4 * A, HW)),
            _bcast((10 * A, HW)),
            _bcast((10 * A, HW)),
        ],
        out_specs=pl.BlockSpec((16 * A, HW), lambda b: (0, b)),
        compiler_params=pltpu.CompilerParams(
            dimension_semantics=("parallel",)),
    )(x, shift, wf_t, b_conv, wh_t, bh_t, masks, pb, plc, plsv)

    # XLA-side layout plumbing only: (16A, B*HW) -> (N, 16),
    # n = (b*H*W + pix)*A + a.
    N = B * HW * A
    packed = jnp.transpose(packed_t.reshape(A, 16, B, HW),
                           (2, 3, 0, 1)).reshape(N, 16)
    face_score = packed[:, 0:1]
    bbox = packed[:, 1:5]
    ldmk = packed[:, 5:15].reshape(N, 5, 2)
    return face_score, bbox, ldmk


# ---------------------------------------------------------------- reference --

def _reference_forward(images, params, prior_box, A=2):
    """Pure-JAX re-implementation of the original (unfused) dataflow."""
    B, C, H, W = images.shape
    x = jnp.transpose(images, (0, 2, 3, 1)).astype(jnp.float32)
    xn = (2.0 * x - 1.0 - params["mean"].reshape(1, 1, 1, C)) \
        / params["std"].reshape(1, 1, 1, C)
    xb = xn[..., ::-1]                                   # RGB -> BGR
    xp = jnp.pad(xb, ((0, 0), (1, 1), (1, 1), (0, 0)))
    M = B * H * W
    acc = jnp.zeros((M, params["w_conv"].shape[3]), jnp.float32)
    for dy in range(3):
        for dx in range(3):
            patch = xp[:, dy:dy + H, dx:dx + W, :].reshape(M, C)
            acc = acc + patch @ params["w_conv"][dy, dx]
    feat = jnp.maximum(acc + params["b_conv"], 0.0)
    head = feat @ params["w_head"] + params["b_head"]
    loc = head[:, :4 * A].reshape(-1, 4)
    cls = head[:, 4 * A:6 * A].reshape(-1, 2)
    ldm = head[:, 6 * A:].reshape(-1, 10)
    pri = jnp.tile(prior_box, (B, 1))
    centers = pri[:, :2] + loc[:, :2] * 0.1 * pri[:, 2:]
    sizes = pri[:, 2:] * jnp.exp(loc[:, 2:] * 0.2)
    bbox = jnp.clip(jnp.concatenate([centers - 0.5 * sizes,
                                     centers + 0.5 * sizes], axis=1), 0.0, 1.0)
    score = jax.nn.softmax(cls, axis=-1)[:, 1:]
    lm = jnp.tile(pri[:, :2], (1, 5)) + ldm * 0.1 * jnp.tile(pri[:, 2:], (1, 5))
    return score, bbox, lm.reshape(-1, 5, 2)


# --------------------------------------------------------------------- main --

if __name__ == "__main__":
    B, C, H, W, A = 2, 3, 16, 16, 2
    key = jax.random.PRNGKey(0)
    images = jax.random.uniform(key, (B, C, H, W), jnp.float32)  # raw RGB [0,1]

    params = make_params(C_in=C, C_feat=32, A=A)
    prior_box = make_prior_box(H, W, A=A)

    fn = jax.jit(lambda img: face_kp_predictor(img, params, prior_box, A=A))
    face_score, bbox, ldmk = fn(images)
    jax.block_until_ready((face_score, bbox, ldmk))

    N = B * H * W * A
    assert face_score.shape == (N, 1) and face_score.dtype == jnp.float32
    assert bbox.shape == (N, 4)
    assert ldmk.shape == (N, 5, 2)

    ref_score, ref_bbox, ref_ldmk = _reference_forward(images, params, prior_box, A=A)
    # bf16 matmul operands (f32 accumulate / f32 decode) -> mildly relaxed tols;
    # layout/semantic bugs would show up as O(0.1) errors.
    assert float(jnp.max(jnp.abs(bbox - ref_bbox))) < 5e-3
    assert float(jnp.max(jnp.abs(ldmk - ref_ldmk))) < 5e-3
    assert float(jnp.max(jnp.abs(face_score - ref_score))) < 2e-2
    assert bool(jnp.all(bbox >= 0.0)) and bool(jnp.all(bbox <= 1.0))
    assert bool(jnp.all(face_score >= 0.0)) and bool(jnp.all(face_score <= 1.0))
    print("KERNEL_OK")
</pallas_src>

<mosaic_0001>
module attributes {stable_mosaic.version = 11 : i64} {
  func.func @_face_dfa_kernel(%arg0: i32, %arg1: memref<1x3x256xf32, #tpu.memory_space<vmem>>, %arg2: memref<3x1xf32, #tpu.memory_space<vmem>>, %arg3: memref<32x32xbf16, #tpu.memory_space<vmem>>, %arg4: memref<32x1xf32, #tpu.memory_space<vmem>>, %arg5: memref<32x32xbf16, #tpu.memory_space<vmem>>, %arg6: memref<32x1xf32, #tpu.memory_space<vmem>>, %arg7: memref<9x256xf32, #tpu.memory_space<vmem>>, %arg8: memref<8x256xf32, #tpu.memory_space<vmem>>, %arg9: memref<20x256xf32, #tpu.memory_space<vmem>>, %arg10: memref<20x256xf32, #tpu.memory_space<vmem>>, %arg11: memref<32x256xf32, #tpu.memory_space<vmem>>) attributes {dimension_semantics = [#tpu.dimension_semantics<parallel>], iteration_bounds = array<i64: 2>, scalar_prefetch = 0 : i64, scratch_operands = 0 : i64, tpu.core_type = #tpu.core_type<tc>, window_params = [{transform_indices = @transform_0, window_bounds = array<i64: 1, 3, 256>}, {pipeline_mode = #tpu.pipeline_mode<synchronous>, transform_indices = @transform_1, window_bounds = array<i64: 3, 1>}, {pipeline_mode = #tpu.pipeline_mode<synchronous>, transform_indices = @transform_2, window_bounds = array<i64: 32, 32>}, {pipeline_mode = #tpu.pipeline_mode<synchronous>, transform_indices = @transform_3, window_bounds = array<i64: 32, 1>}, {pipeline_mode = #tpu.pipeline_mode<synchronous>, transform_indices = @transform_4, window_bounds = array<i64: 32, 32>}, {pipeline_mode = #tpu.pipeline_mode<synchronous>, transform_indices = @transform_5, window_bounds = array<i64: 32, 1>}, {pipeline_mode = #tpu.pipeline_mode<synchronous>, transform_indices = @transform_6, window_bounds = array<i64: 9, 256>}, {pipeline_mode = #tpu.pipeline_mode<synchronous>, transform_indices = @transform_7, window_bounds = array<i64: 8, 256>}, {pipeline_mode = #tpu.pipeline_mode<synchronous>, transform_indices = @transform_8, window_bounds = array<i64: 20, 256>}, {pipeline_mode = #tpu.pipeline_mode<synchronous>, transform_indices = @transform_9, window_bounds = array<i64: 20, 256>}, {transform_indices = @transform_10, window_bounds = array<i64: 32, 256>}]} {
    %c0 = arith.constant 0 : index
    %c0_0 = arith.constant 0 : index
    %c0_1 = arith.constant 0 : index
    %0 = vector.load %arg1[%c0, %c0_0, %c0_1] : memref<1x3x256xf32, #tpu.memory_space<vmem>>, vector<1x3x256xf32>
    %1 = vector.shape_cast %0 : vector<1x3x256xf32> to vector<3x256xf32>
    %c0_2 = arith.constant 0 : index
    %c0_3 = arith.constant 0 : index
    %2 = vector.load %arg2[%c0_2, %c0_3] : memref<3x1xf32, #tpu.memory_space<vmem>>, vector<3x1xf32>
    %3 = vector.broadcast %2 : vector<3x1xf32> to vector<3x256xf32>
    %4 = arith.subf %1, %3 : vector<3x256xf32>
    %5 = vector.extract_strided_slice %4 {offsets = [0, 239], sizes = [3, 17], strides = [1, 1]} : vector<3x256xf32> to vector<3x17xf32>
    %6 = vector.extract_strided_slice %4 {offsets = [0, 0], sizes = [3, 239], strides = [1, 1]} : vector<3x256xf32> to vector<3x239xf32>
    %7 = tpu.concatenate %5, %6 in 1 : vector<3x17xf32>, vector<3x239xf32> -> vector<3x256xf32>
    %c0_4 = arith.constant 0 : index
    %c0_5 = arith.constant 0 : index
    %8 = vector.load %arg7[%c0_4, %c0_5] : memref<9x256xf32, #tpu.memory_space<vmem>>, vector<1x256xf32>
    %9 = vector.broadcast %8 : vector<1x256xf32> to vector<3x256xf32>
    %10 = arith.mulf %7, %9 : vector<3x256xf32>
    %11 = vector.extract_strided_slice %4 {offsets = [0, 240], sizes = [3, 16], strides = [1, 1]} : vector<3x256xf32> to vector<3x16xf32>
    %12 = vector.extract_strided_slice %4 {offsets = [0, 0], sizes = [3, 240], strides = [1, 1]} : vector<3x256xf32> to vector<3x240xf32>
    %13 = tpu.concatenate %11, %12 in 1 : vector<3x16xf32>, vector<3x240xf32> -> vector<3x256xf32>
    %c1 = arith.constant 1 : index
    %c0_6 = arith.constant 0 : index
    %14 = vector.load %arg7[%c1, %c0_6] : memref<9x256xf32, #tpu.memory_space<vmem>>, vector<1x256xf32>
    %15 = vector.broadcast %14 : vector<1x256xf32> to vector<3x256xf32>
    %16 = arith.mulf %13, %15 : vector<3x256xf32>
    %17 = vector.extract_strided_slice %4 {offsets = [0, 241], sizes = [3, 15], strides = [1, 1]} : vector<3x256xf32> to vector<3x15xf32>
    %18 = vector.extract_strided_slice %4 {offsets = [0, 0], sizes = [3, 241], strides = [1, 1]} : vector<3x256xf32> to vector<3x241xf32>
    %19 = tpu.concatenate %17, %18 in 1 : vector<3x15xf32>, vector<3x241xf32> -> vector<3x256xf32>
    %c2 = arith.constant 2 : index
    %c0_7 = arith.constant 0 : index
    %20 = vector.load %arg7[%c2, %c0_7] : memref<9x256xf32, #tpu.memory_space<vmem>>, vector<1x256xf32>
    %21 = vector.broadcast %20 : vector<1x256xf32> to vector<3x256xf32>
    %22 = arith.mulf %19, %21 : vector<3x256xf32>
    %23 = vector.extract_strided_slice %4 {offsets = [0, 255], sizes = [3, 1], strides = [1, 1]} : vector<3x256xf32> to vector<3x1xf32>
    %24 = vector.extract_strided_slice %4 {offsets = [0, 0], sizes = [3, 255], strides = [1, 1]} : vector<3x256xf32> to vector<3x255xf32>
    %25 = tpu.concatenate %23, %24 in 1 : vector<3x1xf32>, vector<3x255xf32> -> vector<3x256xf32>
    %c3 = arith.constant 3 : index
    %c0_8 = arith.constant 0 : index
    %26 = vector.load %arg7[%c3, %c0_8] : memref<9x256xf32, #tpu.memory_space<vmem>>, vector<1x256xf32>
    %27 = vector.broadcast %26 : vector<1x256xf32> to vector<3x256xf32>
    %28 = arith.mulf %25, %27 : vector<3x256xf32>
    %c4 = arith.constant 4 : index
    %c0_9 = arith.constant 0 : index
    %29 = vector.load %arg7[%c4, %c0_9] : memref<9x256xf32, #tpu.memory_space<vmem>>, vector<1x256xf32>
    %30 = vector.broadcast %29 : vector<1x256xf32> to vector<3x256xf32>
    %31 = arith.mulf %4, %30 : vector<3x256xf32>
    %32 = vector.extract_strided_slice %4 {offsets = [0, 1], sizes = [3, 255], strides = [1, 1]} : vector<3x256xf32> to vector<3x255xf32>
    %33 = vector.extract_strided_slice %4 {offsets = [0, 0], sizes = [3, 1], strides = [1, 1]} : vector<3x256xf32> to vector<3x1xf32>
    %34 = tpu.concatenate %32, %33 in 1 : vector<3x255xf32>, vector<3x1xf32> -> vector<3x256xf32>
    %c5 = arith.constant 5 : index
    %c0_10 = arith.constant 0 : index
    %35 = vector.load %arg7[%c5, %c0_10] : memref<9x256xf32, #tpu.memory_space<vmem>>, vector<1x256xf32>
    %36 = vector.broadcast %35 : vector<1x256xf32> to vector<3x256xf32>
    %37 = arith.mulf %34, %36 : vector<3x256xf32>
    %38 = vector.extract_strided_slice %4 {offsets = [0, 15], sizes = [3, 241], strides = [1, 1]} : vector<3x256xf32> to vector<3x241xf32>
    %39 = vector.extract_strided_slice %4 {offsets = [0, 0], sizes = [3, 15], strides = [1, 1]} : vector<3x256xf32> to vector<3x15xf32>
    %40 = tpu.concatenate %38, %39 in 1 : vector<3x241xf32>, vector<3x15xf32> -> vector<3x256xf32>
    %c6 = arith.constant 6 : index
    %c0_11 = arith.constant 0 : index
    %41 = vector.load %arg7[%c6, %c0_11] : memref<9x256xf32, #tpu.memory_space<vmem>>, vector<1x256xf32>
    %42 = vector.broadcast %41 : vector<1x256xf32> to vector<3x256xf32>
    %43 = arith.mulf %40, %42 : vector<3x256xf32>
    %44 = vector.extract_strided_slice %4 {offsets = [0, 16], sizes = [3, 240], strides = [1, 1]} : vector<3x256xf32> to vector<3x240xf32>
    %45 = vector.extract_strided_slice %4 {offsets = [0, 0], sizes = [3, 16], strides = [1, 1]} : vector<3x256xf32> to vector<3x16xf32>
    %46 = tpu.concatenate %44, %45 in 1 : vector<3x240xf32>, vector<3x16xf32> -> vector<3x256xf32>
    %c7 = arith.constant 7 : index
    %c0_12 = arith.constant 0 : index
    %47 = vector.load %arg7[%c7, %c0_12] : memref<9x256xf32, #tpu.memory_space<vmem>>, vector<1x256xf32>
    %48 = vector.broadcast %47 : vector<1x256xf32> to vector<3x256xf32>
    %49 = arith.mulf %46, %48 : vector<3x256xf32>
    %50 = vector.extract_strided_slice %4 {offsets = [0, 17], sizes = [3, 239], strides = [1, 1]} : vector<3x256xf32> to vector<3x239xf32>
    %51 = vector.extract_strided_slice %4 {offsets = [0, 0], sizes = [3, 17], strides = [1, 1]} : vector<3x256xf32> to vector<3x17xf32>
    %52 = tpu.concatenate %50, %51 in 1 : vector<3x239xf32>, vector<3x17xf32> -> vector<3x256xf32>
    %c8 = arith.constant 8 : index
    %c0_13 = arith.constant 0 : index
    %53 = vector.load %arg7[%c8, %c0_13] : memref<9x256xf32, #tpu.memory_space<vmem>>, vector<1x256xf32>
    %54 = vector.broadcast %53 : vector<1x256xf32> to vector<3x256xf32>
    %55 = arith.mulf %52, %54 : vector<3x256xf32>
    %cst = arith.constant 0.000000e+00 : f32
    %56 = vector.broadcast %cst : f32 to vector<5x256xf32>
    %57 = tpu.concatenate %10, %16, %22, %28, %31, %37, %43, %49, %55, %56 in 0 : vector<3x256xf32>, vector<3x256xf32>, vector<3x256xf32>, vector<3x256xf32>, vector<3x256xf32>, vector<3x256xf32>, vector<3x256xf32>, vector<3x256xf32>, vector<3x256xf32>, vector<5x256xf32> -> vector<32x256xf32>
    %58 = arith.truncf %57 : vector<32x256xf32> to vector<32x256xbf16>
    %c0_14 = arith.constant 0 : index
    %c0_15 = arith.constant 0 : index
    %59 = vector.load %arg3[%c0_14, %c0_15] : memref<32x32xbf16, #tpu.memory_space<vmem>>, vector<32x32xbf16>
    %cst_16 = arith.constant dense<0.000000e+00> : vector<32x256xf32>
    %60 = tpu.matmul %59, %58, %cst_16 {dimension_numbers = #tpu.dot_dimension_numbers<[1], [0], [0], [1], [0, 0, 1, 1], [], []>} : vector<32x32xbf16>, vector<32x256xbf16>, vector<32x256xf32> -> vector<32x256xf32>
    %c0_17 = arith.constant 0 : index
    %c0_18 = arith.constant 0 : index
    %61 = vector.load %arg4[%c0_17, %c0_18] : memref<32x1xf32, #tpu.memory_space<vmem>>, vector<32x1xf32>
    %62 = vector.broadcast %61 : vector<32x1xf32> to vector<32x256xf32>
    %63 = arith.addf %60, %62 : vector<32x256xf32>
    %cst_19 = arith.constant 0.000000e+00 : f32
    %64 = vector.broadcast %cst_19 : f32 to vector<32x256xf32>
    %65 = arith.maximumf %63, %64 : vector<32x256xf32>
    %c0_20 = arith.constant 0 : index
    %c0_21 = arith.constant 0 : index
    %66 = vector.load %arg5[%c0_20, %c0_21] : memref<32x32xbf16, #tpu.memory_space<vmem>>, vector<32x32xbf16>
    %67 = arith.truncf %65 : vector<32x256xf32> to vector<32x256xbf16>
    %cst_22 = arith.constant dense<0.000000e+00> : vector<32x256xf32>
    %68 = tpu.matmul %66, %67, %cst_22 {dimension_numbers = #tpu.dot_dimension_numbers<[1], [0], [0], [1], [0, 0, 1, 1], [], []>} : vector<32x32xbf16>, vector<32x256xbf16>, vector<32x256xf32> -> vector<32x256xf32>
    %c0_23 = arith.constant 0 : index
    %c0_24 = arith.constant 0 : index
    %69 = vector.load %arg6[%c0_23, %c0_24] : memref<32x1xf32, #tpu.memory_space<vmem>>, vector<32x1xf32>
    %70 = vector.broadcast %69 : vector<32x1xf32> to vector<32x256xf32>
    %71 = arith.addf %68, %70 : vector<32x256xf32>
    %72 = vector.extract_strided_slice %71 {offsets = [0, 0], sizes = [16, 256], strides = [1, 1]} : vector<32x256xf32> to vector<16x256xf32>
    %73 = vector.extract_strided_slice %72 {offsets = [0, 0], sizes = [1, 256], strides = [1, 1]} : vector<16x256xf32> to vector<1x256xf32>
    %74 = vector.extract_strided_slice %72 {offsets = [1, 0], sizes = [1, 256], strides = [1, 1]} : vector<16x256xf32> to vector<1x256xf32>
    %75 = arith.subf %73, %74 : vector<1x256xf32>
    %76 = math.exp %75 : vector<1x256xf32>
    %cst_25 = arith.constant 1.000000e+00 : f32
    %77 = vector.broadcast %cst_25 : f32 to vector<1x256xf32>
    %78 = arith.addf %77, %76 : vector<1x256xf32>
    %cst_26 = arith.constant 1.000000e+00 : f32
    %79 = vector.broadcast %cst_26 : f32 to vector<1x256xf32>
    %80 = arith.divf %79, %78 : vector<1x256xf32>
    %c0_27 = arith.constant 0 : index
    %c0_28 = arith.constant 0 : index
    %81 = vector.load %arg11[%c0_27, %c0_28] : memref<32x256xf32, #tpu.memory_space<vmem>>, vector<1x256xf32>
    tpu.vector_store %arg11[%c0_27, %c0_28], %80 {strides = array<i32>} : memref<32x256xf32, #tpu.memory_space<vmem>>, vector<1x256xf32>,
    %c0_29 = arith.constant 0 : index
    %c0_30 = arith.constant 0 : index
    %82 = vector.load %arg8[%c0_29, %c0_30] : memref<8x256xf32, #tpu.memory_space<vmem>>, vector<2x256xf32>
    %c2_31 = arith.constant 2 : index
    %c0_32 = arith.constant 0 : index
    %83 = vector.load %arg8[%c2_31, %c0_32] : memref<8x256xf32, #tpu.memory_space<vmem>>, vector<2x256xf32>
    %84 = vector.extract_strided_slice %72 {offsets = [2, 0], sizes = [2, 256], strides = [1, 1]} : vector<16x256xf32> to vector<2x256xf32>
    %cst_33 = arith.constant 1.000000e-01 : f32
    %85 = vector.broadcast %cst_33 : f32 to vector<2x256xf32>
    %86 = arith.mulf %85, %83 : vector<2x256xf32>
    %87 = arith.mulf %84, %86 : vector<2x256xf32>
    %88 = arith.addf %82, %87 : vector<2x256xf32>
    %89 = vector.extract_strided_slice %72 {offsets = [4, 0], sizes = [2, 256], strides = [1, 1]} : vector<16x256xf32> to vector<2x256xf32>
    %cst_34 = arith.constant 2.000000e-01 : f32
    %90 = vector.broadcast %cst_34 : f32 to vector<2x256xf32>
    %91 = arith.mulf %89, %90 : vector<2x256xf32>
    %92 = math.exp %91 : vector<2x256xf32>
    %93 = arith.mulf %83, %92 : vector<2x256xf32>
    %cst_35 = arith.constant 5.000000e-01 : f32
    %94 = vector.broadcast %cst_35 : f32 to vector<2x256xf32>
    %95 = arith.mulf %94, %93 : vector<2x256xf32>
    %96 = arith.subf %88, %95 : vector<2x256xf32>
    %cst_36 = arith.constant 0.000000e+00 : f32
    %cst_37 = arith.constant 1.000000e+00 : f32
    %97 = vector.broadcast %cst_36 : f32 to vector<2x256xf32>
    %98 = arith.maximumf %97, %96 : vector<2x256xf32>
    %99 = vector.broadcast %cst_37 : f32 to vector<2x256xf32>
    %100 = arith.minimumf %99, %98 : vector<2x256xf32>
    %c1_38 = arith.constant 1 : index
    %c0_39 = arith.constant 0 : index
    %101 = vector.load %arg11[%c1_38, %c0_39] : memref<32x256xf32, #tpu.memory_space<vmem>>, vector<2x256xf32>
    tpu.vector_store %arg11[%c1_38, %c0_39], %100 {strides = array<i32>} : memref<32x256xf32, #tpu.memory_space<vmem>>, vector<2x256xf32>,
    %cst_40 = arith.constant 5.000000e-01 : f32
    %102 = vector.broadcast %cst_40 : f32 to vector<2x256xf32>
    %103 = arith.mulf %102, %93 : vector<2x256xf32>
    %104 = arith.addf %88, %103 : vector<2x256xf32>
    %cst_41 = arith.constant 0.000000e+00 : f32
    %cst_42 = arith.constant 1.000000e+00 : f32
    %105 = vector.broadcast %cst_41 : f32 to vector<2x256xf32>
    %106 = arith.maximumf %105, %104 : vector<2x256xf32>
    %107 = vector.broadcast %cst_42 : f32 to vector<2x256xf32>
    %108 = arith.minimumf %107, %106 : vector<2x256xf32>
    %c3_43 = arith.constant 3 : index
    %c0_44 = arith.constant 0 : index
    %109 = vector.load %arg11[%c3_43, %c0_44] : memref<32x256xf32, #tpu.memory_space<vmem>>, vector<2x256xf32>
    tpu.vector_store %arg11[%c3_43, %c0_44], %108 {strides = array<i32>} : memref<32x256xf32, #tpu.memory_space<vmem>>, vector<2x256xf32>,
    %c0_45 = arith.constant 0 : index
    %c0_46 = arith.constant 0 : index
    %110 = vector.load %arg9[%c0_45, %c0_46] : memref<20x256xf32, #tpu.memory_space<vmem>>, vector<10x256xf32>
    %111 = vector.extract_strided_slice %72 {offsets = [6, 0], sizes = [10, 256], strides = [1, 1]} : vector<16x256xf32> to vector<10x256xf32>
    %c0_47 = arith.constant 0 : index
    %c0_48 = arith.constant 0 : index
    %112 = vector.load %arg10[%c0_47, %c0_48] : memref<20x256xf32, #tpu.memory_space<vmem>>, vector<10x256xf32>
    %113 = arith.mulf %111, %112 : vector<10x256xf32>
    %114 = arith.addf %110, %113 : vector<10x256xf32>
    %c5_49 = arith.constant 5 : index
    %c0_50 = arith.constant 0 : index
    %115 = vector.load %arg11[%c5_49, %c0_50] : memref<32x256xf32, #tpu.memory_space<vmem>>, vector<10x256xf32>
    tpu.vector_store %arg11[%c5_49, %c0_50], %114 {strides = array<i32>} : memref<32x256xf32, #tpu.memory_space<vmem>>, vector<10x256xf32>,
    %cst_51 = arith.constant 0.000000e+00 : f32
    %116 = vector.broadcast %cst_51 : f32 to vector<1x256xf32>
    %c15 = arith.constant 15 : index
    %c0_52 = arith.constant 0 : index
    %117 = vector.load %arg11[%c15, %c0_52] : memref<32x256xf32, #tpu.memory_space<vmem>>, vector<1x256xf32>
    tpu.vector_store %arg11[%c15, %c0_52], %116 {strides = array<i32>} : memref<32x256xf32, #tpu.memory_space<vmem>>, vector<1x256xf32>,
    %118 = vector.extract_strided_slice %71 {offsets = [16, 0], sizes = [16, 256], strides = [1, 1]} : vector<32x256xf32> to vector<16x256xf32>
    %119 = vector.extract_strided_slice %118 {offsets = [0, 0], sizes = [1, 256], strides = [1, 1]} : vector<16x256xf32> to vector<1x256xf32>
    %120 = vector.extract_strided_slice %118 {offsets = [1, 0], sizes = [1, 256], strides = [1, 1]} : vector<16x256xf32> to vector<1x256xf32>
    %121 = arith.subf %119, %120 : vector<1x256xf32>
    %122 = math.exp %121 : vector<1x256xf32>
    %cst_53 = arith.constant 1.000000e+00 : f32
    %123 = vector.broadcast %cst_53 : f32 to vector<1x256xf32>
    %124 = arith.addf %123, %122 : vector<1x256xf32>
    %cst_54 = arith.constant 1.000000e+00 : f32
    %125 = vector.broadcast %cst_54 : f32 to vector<1x256xf32>
    %126 = arith.divf %125, %124 : vector<1x256xf32>
    %c16 = arith.constant 16 : index
    %c0_55 = arith.constant 0 : index
    %127 = vector.load %arg11[%c16, %c0_55] : memref<32x256xf32, #tpu.memory_space<vmem>>, vector<1x256xf32>
    tpu.vector_store %arg11[%c16, %c0_55], %126 {strides = array<i32>} : memref<32x256xf32, #tpu.memory_space<vmem>>, vector<1x256xf32>,
    %c4_56 = arith.constant 4 : index
    %c0_57 = arith.constant 0 : index
    %128 = vector.load %arg8[%c4_56, %c0_57] : memref<8x256xf32, #tpu.memory_space<vmem>>, vector<2x256xf32>
    %c6_58 = arith.constant 6 : index
    %c0_59 = arith.constant 0 : index
    %129 = vector.load %arg8[%c6_58, %c0_59] : memref<8x256xf32, #tpu.memory_space<vmem>>, vector<2x256xf32>
    %130 = vector.extract_strided_slice %118 {offsets = [2, 0], sizes = [2, 256], strides = [1, 1]} : vector<16x256xf32> to vector<2x256xf32>
    %cst_60 = arith.constant 1.000000e-01 : f32
    %131 = vector.broadcast %cst_60 : f32 to vector<2x256xf32>
    %132 = arith.mulf %131, %129 : vector<2x256xf32>
    %133 = arith.mulf %130, %132 : vector<2x256xf32>
    %134 = arith.addf %128, %133 : vector<2x256xf32>
    %135 = vector.extract_strided_slice %118 {offsets = [4, 0], sizes = [2, 256], strides = [1, 1]} : vector<16x256xf32> to vector<2x256xf32>
    %cst_61 = arith.constant 2.000000e-01 : f32
    %136 = vector.broadcast %cst_61 : f32 to vector<2x256xf32>
    %137 = arith.mulf %135, %136 : vector<2x256xf32>
    %138 = math.exp %137 : vector<2x256xf32>
    %139 = arith.mulf %129, %138 : vector<2x256xf32>
    %cst_62 = arith.constant 5.000000e-01 : f32
    %140 = vector.broadcast %cst_62 : f32 to vector<2x256xf32>
    %141 = arith.mulf %140, %139 : vector<2x256xf32>
    %142 = arith.subf %134, %141 : vector<2x256xf32>
    %cst_63 = arith.constant 0.000000e+00 : f32
    %cst_64 = arith.constant 1.000000e+00 : f32
    %143 = vector.broadcast %cst_63 : f32 to vector<2x256xf32>
    %144 = arith.maximumf %143, %142 : vector<2x256xf32>
    %145 = vector.broadcast %cst_64 : f32 to vector<2x256xf32>
    %146 = arith.minimumf %145, %144 : vector<2x256xf32>
    %c17 = arith.constant 17 : index
    %c0_65 = arith.constant 0 : index
    %147 = vector.load %arg11[%c17, %c0_65] : memref<32x256xf32, #tpu.memory_space<vmem>>, vector<2x256xf32>
    tpu.vector_store %arg11[%c17, %c0_65], %146 {strides = array<i32>} : memref<32x256xf32, #tpu.memory_space<vmem>>, vector<2x256xf32>,
    %cst_66 = arith.constant 5.000000e-01 : f32
    %148 = vector.broadcast %cst_66 : f32 to vector<2x256xf32>
    %149 = arith.mulf %148, %139 : vector<2x256xf32>
    %150 = arith.addf %134, %149 : vector<2x256xf32>
    %cst_67 = arith.constant 0.000000e+00 : f32
    %cst_68 = arith.constant 1.000000e+00 : f32
    %151 = vector.broadcast %cst_67 : f32 to vector<2x256xf32>
    %152 = arith.maximumf %151, %150 : vector<2x256xf32>
    %153 = vector.broadcast %cst_68 : f32 to vector<2x256xf32>
    %154 = arith.minimumf %153, %152 : vector<2x256xf32>
    %c19 = arith.constant 19 : index
    %c0_69 = arith.constant 0 : index
    %155 = vector.load %arg11[%c19, %c0_69] : memref<32x256xf32, #tpu.memory_space<vmem>>, vector<2x256xf32>
    tpu.vector_store %arg11[%c19, %c0_69], %154 {strides = array<i32>} : memref<32x256xf32, #tpu.memory_space<vmem>>, vector<2x256xf32>,
    %c10 = arith.constant 10 : index
    %c0_70 = arith.constant 0 : index
    %156 = vector.load %arg9[%c10, %c0_70] : memref<20x256xf32, #tpu.memory_space<vmem>>, vector<10x256xf32>
    %157 = vector.extract_strided_slice %118 {offsets = [6, 0], sizes = [10, 256], strides = [1, 1]} : vector<16x256xf32> to vector<10x256xf32>
    %c10_71 = arith.constant 10 : index
    %c0_72 = arith.constant 0 : index
    %158 = vector.load %arg10[%c10_71, %c0_72] : memref<20x256xf32, #tpu.memory_space<vmem>>, vector<10x256xf32>
    %159 = arith.mulf %157, %158 : vector<10x256xf32>
    %160 = arith.addf %156, %159 : vector<10x256xf32>
    %c21 = arith.constant 21 : index
    %c0_73 = arith.constant 0 : index
    %161 = vector.load %arg11[%c21, %c0_73] : memref<32x256xf32, #tpu.memory_space<vmem>>, vector<10x256xf32>
    tpu.vector_store %arg11[%c21, %c0_73], %160 {strides = array<i32>} : memref<32x256xf32, #tpu.memory_space<vmem>>, vector<10x256xf32>,
    %cst_74 = arith.constant 0.000000e+00 : f32
    %162 = vector.broadcast %cst_74 : f32 to vector<1x256xf32>
    %c31 = arith.constant 31 : index
    %c0_75 = arith.constant 0 : index
    %163 = vector.load %arg11[%c31, %c0_75] : memref<32x256xf32, #tpu.memory_space<vmem>>, vector<1x256xf32>
    tpu.vector_store %arg11[%c31, %c0_75], %162 {strides = array<i32>} : memref<32x256xf32, #tpu.memory_space<vmem>>, vector<1x256xf32>,
    return
  }
  func.func @transform_0(%arg0: i32) -> (i32, i32, i32) {
    %c0_i32 = arith.constant 0 : i32
    %c0_i32_0 = arith.constant 0 : i32
    %c0_i32_1 = arith.constant 0 : i32
    return %arg0, %c0_i32, %c0_i32_0 : i32, i32, i32
  }
  func.func @transform_1(%arg0: i32) -> (i32, i32) {
    %c0_i32 = arith.constant 0 : i32
    %c0_i32_0 = arith.constant 0 : i32
    %c0_i32_1 = arith.constant 0 : i32
    return %c0_i32, %c0_i32_0 : i32, i32
  }
  func.func @transform_2(%arg0: i32) -> (i32, i32) {
    %c0_i32 = arith.constant 0 : i32
    %c0_i32_0 = arith.constant 0 : i32
    %c0_i32_1 = arith.constant 0 : i32
    return %c0_i32, %c0_i32_0 : i32, i32
  }
  func.func @transform_3(%arg0: i32) -> (i32, i32) {
    %c0_i32 = arith.constant 0 : i32
    %c0_i32_0 = arith.constant 0 : i32
    %c0_i32_1 = arith.constant 0 : i32
    return %c0_i32, %c0_i32_0 : i32, i32
  }
  func.func @transform_4(%arg0: i32) -> (i32, i32) {
    %c0_i32 = arith.constant 0 : i32
    %c0_i32_0 = arith.constant 0 : i32
    %c0_i32_1 = arith.constant 0 : i32
    return %c0_i32, %c0_i32_0 : i32, i32
  }
  func.func @transform_5(%arg0: i32) -> (i32, i32) {
    %c0_i32 = arith.constant 0 : i32
    %c0_i32_0 = arith.constant 0 : i32
    %c0_i32_1 = arith.constant 0 : i32
    return %c0_i32, %c0_i32_0 : i32, i32
  }
  func.func @transform_6(%arg0: i32) -> (i32, i32) {
    %c0_i32 = arith.constant 0 : i32
    %c0_i32_0 = arith.constant 0 : i32
    %c0_i32_1 = arith.constant 0 : i32
    return %c0_i32, %c0_i32_0 : i32, i32
  }
  func.func @transform_7(%arg0: i32) -> (i32, i32) {
    %c0_i32 = arith.constant 0 : i32
    %c0_i32_0 = arith.constant 0 : i32
    %c0_i32_1 = arith.constant 0 : i32
    return %c0_i32, %c0_i32_0 : i32, i32
  }
  func.func @transform_8(%arg0: i32) -> (i32, i32) {
    %c0_i32 = arith.constant 0 : i32
    %c0_i32_0 = arith.constant 0 : i32
    %c0_i32_1 = arith.constant 0 : i32
    return %c0_i32, %c0_i32_0 : i32, i32
  }
  func.func @transform_9(%arg0: i32) -> (i32, i32) {
    %c0_i32 = arith.constant 0 : i32
    %c0_i32_0 = arith.constant 0 : i32
    %c0_i32_1 = arith.constant 0 : i32
    return %c0_i32, %c0_i32_0 : i32, i32
  }
  func.func @transform_10(%arg0: i32) -> (i32, i32) {
    %c0_i32 = arith.constant 0 : i32
    %c0_i32_0 = arith.constant 0 : i32
    return %c0_i32, %arg0 : i32, i32
  }
}

</mosaic_0001>

<llo_original>
// kernel: tile.11
$region0: #{tile.11}
  %s0 = inlined_call_operand.vmem [shape: f32[2,5,2,256], index: 0, kind: input, shape index: {}]
  %s1 = inlined_call_operand.vmem [shape: f32[20,256], index: 1, kind: output, shape index: {}]
  $region1: #{tile.11} parent=0
    #allocation0 [shape = 'u8[81920]{0}', space=vmem, size = 0x14000, scoped, tag = 'scoped mem for input reshape']
    %s3 = sshllo.u32 0, 2
    %s4 = smul.addr 2, 19
    %s5 = scalar_lea.vmem %s0, %s4
    %v6 = vld [vmem:[%s5] sm:%s3]
    %s7 = scalar_lea.vmem [#allocation0], 152
    %8 = vst [vmem:[%s7] sm:%s3] %v6
    %s9 = smul.addr 2, 18
    %s10 = scalar_lea.vmem %s0, %s9
    %v11 = vld [vmem:[%s10] sm:%s3]
    %s12 = scalar_lea.vmem [#allocation0], 144
    %13 = vst [vmem:[%s12] sm:%s3] %v11
    %s14 = smul.addr 2, 17
    %s15 = scalar_lea.vmem %s0, %s14
    %v16 = vld [vmem:[%s15] sm:%s3]
    %s17 = scalar_lea.vmem [#allocation0], 136
    %18 = vst [vmem:[%s17] sm:%s3] %v16
    %s19 = smul.addr 2, 16
    %s20 = scalar_lea.vmem %s0, %s19
    %v21 = vld [vmem:[%s20] sm:%s3]
    %s22 = scalar_lea.vmem [#allocation0], 128
    %23 = vst [vmem:[%s22] sm:%s3] %v21
    %s24 = smul.addr 2, 15
    %s25 = scalar_lea.vmem %s0, %s24
    %v26 = vld [vmem:[%s25] sm:%s3]
    %s27 = scalar_lea.vmem [#allocation0], 120
    %28 = vst [vmem:[%s27] sm:%s3] %v26
    %s29 = smul.addr 2, 14
    %s30 = scalar_lea.vmem %s0, %s29
    %v31 = vld [vmem:[%s30] sm:%s3]
    %s32 = scalar_lea.vmem [#allocation0], 112
    %33 = vst [vmem:[%s32] sm:%s3] %v31
    %s34 = smul.addr 2, 13
    %s35 = scalar_lea.vmem %s0, %s34
    %v36 = vld [vmem:[%s35] sm:%s3]
    %s37 = scalar_lea.vmem [#allocation0], 104
    %38 = vst [vmem:[%s37] sm:%s3] %v36
    %s39 = smul.addr 2, 12
    %s40 = scalar_lea.vmem %s0, %s39
    %v41 = vld [vmem:[%s40] sm:%s3]
    %s42 = scalar_lea.vmem [#allocation0], 96
    %43 = vst [vmem:[%s42] sm:%s3] %v41
    %s44 = smul.addr 2, 11
    %s45 = scalar_lea.vmem %s0, %s44
    %v46 = vld [vmem:[%s45] sm:%s3]
    %s47 = scalar_lea.vmem [#allocation0], 88
    %48 = vst [vmem:[%s47] sm:%s3] %v46
    %s49 = smul.addr 2, 10
    %s50 = scalar_lea.vmem %s0, %s49
    %v51 = vld [vmem:[%s50] sm:%s3]
    %s52 = scalar_lea.vmem [#allocation0], 80
    %53 = vst [vmem:[%s52] sm:%s3] %v51
    %s54 = smul.addr 2, 9
    %s55 = scalar_lea.vmem %s0, %s54
    %v56 = vld [vmem:[%s55] sm:%s3]
    %s57 = scalar_lea.vmem [#allocation0], 72
    %58 = vst [vmem:[%s57] sm:%s3] %v56
    %s59 = smul.addr 2, 8
    %s60 = scalar_lea.vmem %s0, %s59
    %v61 = vld [vmem:[%s60] sm:%s3]
    %s62 = scalar_lea.vmem [#allocation0], 64
    %63 = vst [vmem:[%s62] sm:%s3] %v61
    %s64 = smul.addr 2, 7
    %s65 = scalar_lea.vmem %s0, %s64
    %v66 = vld [vmem:[%s65] sm:%s3]
    %s67 = scalar_lea.vmem [#allocation0], 56
    %68 = vst [vmem:[%s67] sm:%s3] %v66
    %s69 = smul.addr 2, 6
    %s70 = scalar_lea.vmem %s0, %s69
    %v71 = vld [vmem:[%s70] sm:%s3]
    %s72 = scalar_lea.vmem [#allocation0], 48
    %73 = vst [vmem:[%s72] sm:%s3] %v71
    %s74 = smul.addr 2, 5
    %s75 = scalar_lea.vmem %s0, %s74
    %v76 = vld [vmem:[%s75] sm:%s3]
    %s77 = scalar_lea.vmem [#allocation0], 40
    %78 = vst [vmem:[%s77] sm:%s3] %v76
    %s79 = smul.addr 2, 4
    %s80 = scalar_lea.vmem %s0, %s79
    %v81 = vld [vmem:[%s80] sm:%s3]
    %s82 = scalar_lea.vmem [#allocation0], 32
    %83 = vst [vmem:[%s82] sm:%s3] %v81
    %s84 = smul.addr 2, 3
    %s85 = scalar_lea.vmem %s0, %s84
    %v86 = vld [vmem:[%s85] sm:%s3]
    %s87 = scalar_lea.vmem [#allocation0], 24
    %88 = vst [vmem:[%s87] sm:%s3] %v86
    %s89 = smul.addr 2, 2
    %s90 = scalar_lea.vmem %s0, %s89
    %v91 = vld [vmem:[%s90] sm:%s3]
    %s92 = scalar_lea.vmem [#allocation0], 16
    %93 = vst [vmem:[%s92] sm:%s3] %v91
    %s94 = scalar_lea.vmem %s0, 2
    %v95 = vld [vmem:[%s94] sm:%s3]
    %s96 = scalar_lea.vmem [#allocation0], 8
    %97 = vst [vmem:[%s96] sm:%s3] %v95
    %v98 = vld [vmem:[%s0] sm:%s3]
    %99 = vst [vmem:[#allocation0] sm:%s3] %v98
    %v100 = vld [vmem:[#allocation0] sm:$0x3]
    %101 = vst [vmem:[%s1] sm:$0x3] %v100
    %s102 = scalar_lea.vmem [#allocation0], 8
    %v103 = vld [vmem:[%s102] sm:$0x3]
    %s104 = scalar_lea.vmem %s1, 8
    %105 = vst [vmem:[%s104] sm:$0x3] %v103
    %s106 = scalar_lea.vmem [#allocation0], 16
    %v107 = vld [vmem:[%s106] sm:$0x3]
    %s108 = scalar_lea.vmem %s1, 2
    %109 = vst [vmem:[%s108] sm:$0x3] %v107
    %s110 = scalar_lea.vmem [#allocation0], 24
    %v111 = vld [vmem:[%s110] sm:$0x3]
    %s112 = scalar_lea.vmem %s1, 10
    %113 = vst [vmem:[%s112] sm:$0x3] %v111
    %s114 = scalar_lea.vmem [#allocation0], 32
    %v115 = vld [vmem:[%s114] sm:$0x3]
    %s116 = scalar_lea.vmem %s1, 4
    %117 = vst [vmem:[%s116] sm:$0x3] %v115
    %s118 = scalar_lea.vmem [#allocation0], 40
    %v119 = vld [vmem:[%s118] sm:$0x3]
    %s120 = scalar_lea.vmem %s1, 12
    %121 = vst [vmem:[%s120] sm:$0x3] %v119
    %s122 = scalar_lea.vmem [#allocation0], 48
    %v123 = vld [vmem:[%s122] sm:$0x3]
    %s124 = scalar_lea.vmem %s1, 6
    %125 = vst [vmem:[%s124] sm:$0x3] %v123
    %s126 = scalar_lea.vmem [#allocation0], 56
    %v127 = vld [vmem:[%s126] sm:$0x3]
    %s128 = scalar_lea.vmem %s1, 14
    %129 = vst [vmem:[%s128] sm:$0x3] %v127
    %s130 = scalar_lea.vmem [#allocation0], 64
    %v131 = vld [vmem:[%s130] sm:$0x3]
    %s132 = scalar_lea.vmem %s1, 16
    %133 = vst [vmem:[%s132] sm:$0x3] %v131
    %s134 = scalar_lea.vmem [#allocation0], 72
    %v135 = vld [vmem:[%s134] sm:$0x3]
    %s136 = scalar_lea.vmem %s1, 24
    %137 = vst [vmem:[%s136] sm:$0x3] %v135
    %s138 = scalar_lea.vmem [#allocation0], 80
    %v139 = vld [vmem:[%s138] sm:$0x3]
    %s140 = scalar_lea.vmem %s1, 18
    %141 = vst [vmem:[%s140] sm:$0x3] %v139
    %s142 = scalar_lea.vmem [#allocation0], 88
    %v143 = vld [vmem:[%s142] sm:$0x3]
    %s144 = scalar_lea.vmem %s1, 26
    %145 = vst [vmem:[%s144] sm:$0x3] %v143
    %s146 = scalar_lea.vmem [#allocation0], 96
    %v147 = vld [vmem:[%s146] sm:$0x3]
    %s148 = scalar_lea.vmem %s1, 20
    %149 = vst [vmem:[%s148] sm:$0x3] %v147
    %s150 = scalar_lea.vmem [#allocation0], 104
    %v151 = vld [vmem:[%s150] sm:$0x3]
    %s152 = scalar_lea.vmem %s1, 28
    %153 = vst [vmem:[%s152] sm:$0x3] %v151
    %s154 = scalar_lea.vmem [#allocation0], 112
    %v155 = vld [vmem:[%s154] sm:$0x3]
    %s156 = scalar_lea.vmem %s1, 22
    %157 = vst [vmem:[%s156] sm:$0x3] %v155
    %s158 = scalar_lea.vmem [#allocation0], 120
    %v159 = vld [vmem:[%s158] sm:$0x3]
    %s160 = scalar_lea.vmem %s1, 30
    %161 = vst [vmem:[%s160] sm:$0x3] %v159
    %s162 = scalar_lea.vmem [#allocation0], 128
    %v163 = vld [vmem:[%s162] sm:$0x3]
    %s164 = scalar_lea.vmem %s1, 32
    %165 = vst [vmem:[%s164] sm:$0x3] %v163
    %s166 = scalar_lea.vmem [#allocation0], 136
    %v167 = vld [vmem:[%s166] sm:$0x3]
    %s168 = scalar_lea.vmem %s1, 40
    %169 = vst [vmem:[%s168] sm:$0x3] %v167
    %s170 = scalar_lea.vmem [#allocation0], 144
    %v171 = vld [vmem:[%s170] sm:$0x3]
    %s172 = scalar_lea.vmem %s1, 34
    %173 = vst [vmem:[%s172] sm:$0x3] %v171
    %s174 = scalar_lea.vmem [#allocation0], 152
    %v175 = vld [vmem:[%s174] sm:$0x3]
    %s176 = scalar_lea.vmem %s1, 42
    %177 = vst [vmem:[%s176] sm:$0x3] %v175

// kernel: _lambda_.1
$region0: #{_lambda_.1}
  #allocation0 [shape = 'u32[]', space=smem, size = 0x4, offset = 0x4, fixed_abs, tag = 'smem constant byte address 0x4 - core index']
  #allocation1 [shape = 'u32[144,128]{1,0:T(1,128)}', space=vmem, size = 0x12000, scoped, tag = 'internal scratch']
  %s0 = inlined_call_operand.vmem [shape: f32[2,3,256], index: 0, kind: input, shape index: {}]
  %s1 = inlined_call_operand.vmem [shape: f32[3,1], index: 1, kind: input, shape index: {}]
  %s2 = inlined_call_operand.vmem [shape: bf16[32,32], index: 2, kind: input, shape index: {}]
  %s3 = inlined_call_operand.vmem [shape: f32[32,1], index: 3, kind: input, shape index: {}]
  %s4 = inlined_call_operand.vmem [shape: bf16[32,32], index: 4, kind: input, shape index: {}]
  %s5 = inlined_call_operand.vmem [shape: f32[32,1], index: 5, kind: input, shape index: {}]
  %s6 = inlined_call_operand.vmem [shape: f32[9,256], index: 6, kind: input, shape index: {}]
  %s7 = inlined_call_operand.vmem [shape: f32[8,256], index: 7, kind: input, shape index: {}]
  %s8 = inlined_call_operand.vmem [shape: f32[20,256], index: 8, kind: input, shape index: {}]
  %s9 = inlined_call_operand.vmem [shape: f32[20,256], index: 9, kind: input, shape index: {}]
  %s10 = inlined_call_operand.vmem [shape: f32[32,512], index: 10, kind: output, shape index: {}]
  %s11 = sld [smem:[#allocation0]]
  $region92: #{_lambda_.1} parent=0
    _
  %s13 = ssub.s32 1, %s11
  %s14 = scalar_select 0, %s13, %s11
  $region1: #{_lambda_.1} parent=0
    #allocation2 [shape = 'u8[65536]{0}', space=vmem, size = 0x10000, scoped, tag = 'output window, operand 0']
    loop: start=0, step=1, limit=4
    $region2: #{_lambda_.1} parent=1 // loop_pre_header
      _
    $region3: #{_lambda_.1} parent=1 // loop_header
      %s16 = sphi 0, %s20
      %p17 = scmp.ge.s32.totalorder %s16, 4
      %s26 = sphi 0, %s28
      %s29 = sphi 0, %s26
      %s30 = sphi 0, %s29
      %s46 = sphi 0, %s30
      %s50 = sphi 0, %s50
      %s52 = sphi 0, %s50
      %s53 = sphi 0, %s52
      %s67 = sphi 0, %s53
      %s71 = sphi 0, %s71
      %s73 = sphi 0, %s71
      %s74 = sphi 0, %s73
      %s88 = sphi 0, %s74
      %s92 = sphi 0, %s92
      %s94 = sphi 0, %s92
      %s95 = sphi 0, %s94
      %s109 = sphi 0, %s95
      %s113 = sphi 0, %s113
      %s115 = sphi 0, %s113
      %s116 = sphi 0, %s115
      %s130 = sphi 0, %s116
      %s134 = sphi 0, %s134
      %s136 = sphi 0, %s134
      %s137 = sphi 0, %s136
      %s151 = sphi 0, %s137
      %s155 = sphi 0, %s155
      %s157 = sphi 0, %s155
      %s158 = sphi 0, %s157
      %s172 = sphi 0, %s158
      %s176 = sphi 0, %s176
      %s178 = sphi 0, %s176
      %s179 = sphi 0, %s178
      %s193 = sphi 0, %s179
      %s197 = sphi 0, %s197
      %s199 = sphi 0, %s197
      %s200 = sphi 0, %s199
      %s214 = sphi 0, %s200
      %s218 = sphi 0, %s218
      %s220 = sphi 0, %s218
      %s221 = sphi 0, %s220
      %s235 = sphi 0, %s221
      %s241 = sphi 0, %s243
      %s244 = sphi 0, %s241
      %s245 = sphi 0, %s244
      %s261 = sphi 0, %s245
    $region4: #{_lambda_.1} parent=1 // loop_header_branch
      %19 = sbr.rel (%p17) target = $region8
    $region5: #{_lambda_.1} parent=1 // loop_body
      %s21 = ssub.s32 %s16, 1
      %s22 = ssub.s32 %s16, 2
      %s23 = sadd.s32 %s16, 1
      %s24 = ssub.s32 %s16, %s23
      %p25 = scmp.eq.s32.totalorder %s24, 0
      %s27 = sadd.s32 %s26, 1
      %s28 = scalar_select %p25, %s26, %s27
      %p31 = pneg %p25
      %p32 = scmp.eq.s32.totalorder %s16, 1
      %p33 = por %p31, %p32
      %p34 = scmp.ne.s32.totalorder %s26, %s29
      %p35 = scmp.eq.s32.totalorder %s16, 0
      %p36 = por %p34, %p35
      %p37 = scmp.ne.s32.totalorder %s26, %s29
      %p38 = scmp.eq.s32.totalorder %s21, 1
      %p39 = por %p37, %p38
      %p40 = scmp.ne.s32.totalorder %s29, %s30
      %p41 = scmp.eq.s32.totalorder %s21, 0
      %p42 = por %p40, %p41
      %p43 = scmp.ne.s32.totalorder %s29, %s30
      %p44 = scmp.eq.s32.totalorder %s22, 1
      %p45 = por %p43, %p44
      %p47 = scmp.ne.s32.totalorder %s30, %s46
      %p48 = scmp.eq.s32.totalorder %s22, 0
      %p49 = por %p47, %p48
      %s51 = sadd.s32 %s50, 1
      %p54 = scmp.eq.s32.totalorder %s16, 1
      %p55 = scmp.ne.s32.totalorder %s50, %s52
      %p56 = scmp.eq.s32.totalorder %s16, 0
      %p57 = por %p55, %p56
      %p58 = scmp.ne.s32.totalorder %s50, %s52
      %p59 = scmp.eq.s32.totalorder %s21, 1
      %p60 = por %p58, %p59
      %p61 = scmp.ne.s32.totalorder %s52, %s53
      %p62 = scmp.eq.s32.totalorder %s21, 0
      %p63 = por %p61, %p62
      %p64 = scmp.ne.s32.totalorder %s52, %s53
      %p65 = scmp.eq.s32.totalorder %s22, 1
      %p66 = por %p64, %p65
      %p68 = scmp.ne.s32.totalorder %s53, %s67
      %p69 = scmp.eq.s32.totalorder %s22, 0
      %p70 = por %p68, %p69
      %s72 = sadd.s32 %s71, 1
      %p75 = scmp.eq.s32.totalorder %s16, 1
      %p76 = scmp.ne.s32.totalorder %s71, %s73
      %p77 = scmp.eq.s32.totalorder %s16, 0
      %p78 = por %p76, %p77
      %p79 = scmp.ne.s32.totalorder %s71, %s73
      %p80 = scmp.eq.s32.totalorder %s21, 1
      %p81 = por %p79, %p80
      %p82 = scmp.ne.s32.totalorder %s73, %s74
      %p83 = scmp.eq.s32.totalorder %s21, 0
      %p84 = por %p82, %p83
      %p85 = scmp.ne.s32.totalorder %s73, %s74
      %p86 = scmp.eq.s32.totalorder %s22, 1
      %p87 = por %p85, %p86
      %p89 = scmp.ne.s32.totalorder %s74, %s88
      %p90 = scmp.eq.s32.totalorder %s22, 0
      %p91 = por %p89, %p90
      %s93 = sadd.s32 %s92, 1
      %p96 = scmp.eq.s32.totalorder %s16, 1
      %p97 = scmp.ne.s32.totalorder %s92, %s94
      %p98 = scmp.eq.s32.totalorder %s16, 0
      %p99 = por %p97, %p98
      %p100 = scmp.ne.s32.totalorder %s92, %s94
      %p101 = scmp.eq.s32.totalorder %s21, 1
      %p102 = por %p100, %p101
      %p103 = scmp.ne.s32.totalorder %s94, %s95
      %p104 = scmp.eq.s32.totalorder %s21, 0
      %p105 = por %p103, %p104
      %p106 = scmp.ne.s32.totalorder %s94, %s95
      %p107 = scmp.eq.s32.totalorder %s22, 1
      %p108 = por %p106, %p107
      %p110 = scmp.ne.s32.totalorder %s95, %s109
      %p111 = scmp.eq.s32.totalorder %s22, 0
      %p112 = por %p110, %p111
      %s114 = sadd.s32 %s113, 1
      %p117 = scmp.eq.s32.totalorder %s16, 1
      %p118 = scmp.ne.s32.totalorder %s113, %s115
      %p119 = scmp.eq.s32.totalorder %s16, 0
      %p120 = por %p118, %p119
      %p121 = scmp.ne.s32.totalorder %s113, %s115
      %p122 = scmp.eq.s32.totalorder %s21, 1
      %p123 = por %p121, %p122
      %p124 = scmp.ne.s32.totalorder %s115, %s116
      %p125 = scmp.eq.s32.totalorder %s21, 0
      %p126 = por %p124, %p125
      %p127 = scmp.ne.s32.totalorder %s115, %s116
      %p128 = scmp.eq.s32.totalorder %s22, 1
      %p129 = por %p127, %p128
      %p131 = scmp.ne.s32.totalorder %s116, %s130
      %p132 = scmp.eq.s32.totalorder %s22, 0
      %p133 = por %p131, %p132
      %s135 = sadd.s32 %s134, 1
      %p138 = scmp.eq.s32.totalorder %s16, 1
      %p139 = scmp.ne.s32.totalorder %s134, %s136
      %p140 = scmp.eq.s32.totalorder %s16, 0
      %p141 = por %p139, %p140
      %p142 = scmp.ne.s32.totalorder %s134, %s136
      %p143 = scmp.eq.s32.totalorder %s21, 1
      %p144 = por %p142, %p143
      %p145 = scmp.ne.s32.totalorder %s136, %s137
      %p146 = scmp.eq.s32.totalorder %s21, 0
      %p147 = por %p145, %p146
      %p148 = scmp.ne.s32.totalorder %s136, %s137
      %p149 = scmp.eq.s32.totalorder %s22, 1
      %p150 = por %p148, %p149
      %p152 = scmp.ne.s32.totalorder %s137, %s151
      %p153 = scmp.eq.s32.totalorder %s22, 0
      %p154 = por %p152, %p153
      %s156 = sadd.s32 %s155, 1
      %p159 = scmp.eq.s32.totalorder %s16, 1
      %p160 = scmp.ne.s32.totalorder %s155, %s157
      %p161 = scmp.eq.s32.totalorder %s16, 0
      %p162 = por %p160, %p161
      %p163 = scmp.ne.s32.totalorder %s155, %s157
      %p164 = scmp.eq.s32.totalorder %s21, 1
      %p165 = por %p163, %p164
      %p166 = scmp.ne.s32.totalorder %s157, %s158
      %p167 = scmp.eq.s32.totalorder %s21, 0
      %p168 = por %p166, %p167
      %p169 = scmp.ne.s32.totalorder %s157, %s158
      %p170 = scmp.eq.s32.totalorder %s22, 1
      %p171 = por %p169, %p170
      %p173 = scmp.ne.s32.totalorder %s158, %s172
      %p174 = scmp.eq.s32.totalorder %s22, 0
      %p175 = por %p173, %p174
      %s177 = sadd.s32 %s176, 1
      %p180 = scmp.eq.s32.totalorder %s16, 1
      %p181 = scmp.ne.s32.totalorder %s176, %s178
      %p182 = scmp.eq.s32.totalorder %s16, 0
      %p183 = por %p181, %p182
      %p184 = scmp.ne.s32.totalorder %s176, %s178
      %p185 = scmp.eq.s32.totalorder %s21, 1
      %p186 = por %p184, %p185
      %p187 = scmp.ne.s32.totalorder %s178, %s179
      %p188 = scmp.eq.s32.totalorder %s21, 0
      %p189 = por %p187, %p188
      %p190 = scmp.ne.s32.totalorder %s178, %s179
      %p191 = scmp.eq.s32.totalorder %s22, 1
      %p192 = por %p190, %p191
      %p194 = scmp.ne.s32.totalorder %s179, %s193
      %p195 = scmp.eq.s32.totalorder %s22, 0
      %p196 = por %p194, %p195
      %s198 = sadd.s32 %s197, 1
      %p201 = scmp.eq.s32.totalorder %s16, 1
      %p202 = scmp.ne.s32.totalorder %s197, %s199
      %p203 = scmp.eq.s32.totalorder %s16, 0
      %p204 = por %p202, %p203
      %p205 = scmp.ne.s32.totalorder %s197, %s199
      %p206 = scmp.eq.s32.totalorder %s21, 1
      %p207 = por %p205, %p206
      %p208 = scmp.ne.s32.totalorder %s199, %s200
      %p209 = scmp.eq.s32.totalorder %s21, 0
      %p210 = por %p208, %p209
      %p211 = scmp.ne.s32.totalorder %s199, %s200
      %p212 = scmp.eq.s32.totalorder %s22, 1
      %p213 = por %p211, %p212
      %p215 = scmp.ne.s32.totalorder %s200, %s214
      %p216 = scmp.eq.s32.totalorder %s22, 0
      %p217 = por %p215, %p216
      %s219 = sadd.s32 %s218, 1
      %p222 = scmp.eq.s32.totalorder %s16, 1
      %p223 = scmp.ne.s32.totalorder %s218, %s220
      %p224 = scmp.eq.s32.totalorder %s16, 0
      %p225 = por %p223, %p224
      %p226 = scmp.ne.s32.totalorder %s218, %s220
      %p227 = scmp.eq.s32.totalorder %s21, 1
      %p228 = por %p226, %p227
      %p229 = scmp.ne.s32.totalorder %s220, %s221
      %p230 = scmp.eq.s32.totalorder %s21, 0
      %p231 = por %p229, %p230
      %p232 = scmp.ne.s32.totalorder %s220, %s221
      %p233 = scmp.eq.s32.totalorder %s22, 1
      %p234 = por %p232, %p233
      %p236 = scmp.ne.s32.totalorder %s221, %s235
      %p237 = scmp.eq.s32.totalorder %s22, 0
      %p238 = por %p236, %p237
      %s239 = ssub.s32 %s16, %s23
      %p240 = scmp.eq.s32.totalorder %s239, 0
      %s242 = sadd.s32 %s241, 1
      %s243 = scalar_select %p240, %s241, %s242
      %p246 = pneg %p240
      %p247 = scmp.eq.s32.totalorder %s16, 1
      %p248 = por %p246, %p247
      %p249 = scmp.ne.s32.totalorder %s241, %s244
      %p250 = scmp.eq.s32.totalorder %s16, 0
      %p251 = por %p249, %p250
      %p252 = scmp.ne.s32.totalorder %s241, %s244
      %p253 = scmp.eq.s32.totalorder %s21, 1
      %p254 = por %p252, %p253
      %p255 = scmp.ne.s32.totalorder %s244, %s245
      %p256 = scmp.eq.s32.totalorder %s21, 0
      %p257 = por %p255, %p256
      %p258 = scmp.ne.s32.totalorder %s244, %s245
      %p259 = scmp.eq.s32.totalorder %s22, 1
      %p260 = por %p258, %p259
      %p262 = scmp.ne.s32.totalorder %s245, %s261
      %p263 = scmp.eq.s32.totalorder %s22, 0
      %p264 = por %p262, %p263
      %p265 = scmp.le.s32.totalorder 1, %s16
      %p266 = scmp.lt.s32.totalorder %s16, 3
      %p267 = pnand %p265, %p266
      %p268 = pneg %p267
      // Predicated region
      $region9: #{_lambda_.1} parent=5 // pred_check
        _
      $region10: #{_lambda_.1} parent=5 // pred_check_branch
        %270 = sbr.rel (%p267) target = $region12
      $region11: #{_lambda_.1} parent=5 // pred_region
        %s271 = ssub.s32 %s16, 1
        // Predicated region
        $region13: #{_lambda_.1} parent=11 // pred_check
          %p272 = pneg %p63
        $region14: #{_lambda_.1} parent=11 // pred_check_branch
          %274 = sbr.rel (%p272) target = $region16
        $region15: #{_lambda_.1} parent=11 // pred_region
          _
        $region16: #{_lambda_.1} parent=11 // pred_fallthru
          _
        // Predicated region
        $region17: #{_lambda_.1} parent=11 // pred_check
          %p275 = pneg %p84
        $region18: #{_lambda_.1} parent=11 // pred_check_branch
          %277 = sbr.rel (%p275) target = $region20
        $region19: #{_lambda_.1} parent=11 // pred_region
          _
        $region20: #{_lambda_.1} parent=11 // pred_fallthru
          _
        // Predicated region
        $region21: #{_lambda_.1} parent=11 // pred_check
          %p278 = pneg %p105
        $region22: #{_lambda_.1} parent=11 // pred_check_branch
          %280 = sbr.rel (%p278) target = $region24
        $region23: #{_lambda_.1} parent=11 // pred_region
          _
        $region24: #{_lambda_.1} parent=11 // pred_fallthru
          _
        // Predicated region
        $region25: #{_lambda_.1} parent=11 // pred_check
          %p281 = pneg %p126
        $region26: #{_lambda_.1} parent=11 // pred_check_branch
          %283 = sbr.rel (%p281) target = $region28
        $region27: #{_lambda_.1} parent=11 // pred_region
          _
        $region28: #{_lambda_.1} parent=11 // pred_fallthru
          _
        // Predicated region
        $region29: #{_lambda_.1} parent=11 // pred_check
          %p284 = pneg %p147
        $region30: #{_lambda_.1} parent=11 // pred_check_branch
          %286 = sbr.rel (%p284) target = $region32
        $region31: #{_lambda_.1} parent=11 // pred_region
          _
        $region32: #{_lambda_.1} parent=11 // pred_fallthru
          _
        // Predicated region
        $region33: #{_lambda_.1} parent=11 // pred_check
          %p287 = pneg %p168
        $region34: #{_lambda_.1} parent=11 // pred_check_branch
          %289 = sbr.rel (%p287) target = $region36
        $region35: #{_lambda_.1} parent=11 // pred_region
          _
        $region36: #{_lambda_.1} parent=11 // pred_fallthru
          _
        // Predicated region
        $region37: #{_lambda_.1} parent=11 // pred_check
          %p290 = pneg %p189
        $region38: #{_lambda_.1} parent=11 // pred_check_branch
          %292 = sbr.rel (%p290) target = $region40
        $region39: #{_lambda_.1} parent=11 // pred_region
          _
        $region40: #{_lambda_.1} parent=11 // pred_fallthru
          _
        // Predicated region
        $region41: #{_lambda_.1} parent=11 // pred_check
          %p293 = pneg %p210
        $region42: #{_lambda_.1} parent=11 // pred_check_branch
          %295 = sbr.rel (%p293) target = $region44
        $region43: #{_lambda_.1} parent=11 // pred_region
          _
        $region44: #{_lambda_.1} parent=11 // pred_fallthru
          _
        // Predicated region
        $region45: #{_lambda_.1} parent=11 // pred_check
          %p296 = pneg %p231
        $region46: #{_lambda_.1} parent=11 // pred_check_branch
          %298 = sbr.rel (%p296) target = $region48
        $region47: #{_lambda_.1} parent=11 // pred_region
          _
        $region48: #{_lambda_.1} parent=11 // pred_fallthru
          _
      $region12: #{_lambda_.1} parent=5 // pred_fallthru
        _
      %p299 = scmp.lt.s32.totalorder %s16, 2
      // Predicated region
      $region49: #{_lambda_.1} parent=5 // pred_check
        %p300 = pneg %p299
      $region50: #{_lambda_.1} parent=5 // pred_check_branch
        %302 = sbr.rel (%p300) target = $region52
      $region51: #{_lambda_.1} parent=5 // pred_region
        // Predicated region
        $region53: #{_lambda_.1} parent=51 // pred_check
          %p303 = pneg %p36
        $region54: #{_lambda_.1} parent=51 // pred_check_branch
          %305 = sbr.rel (%p303) target = $region56
        $region55: #{_lambda_.1} parent=51 // pred_region
          %p306 = scmp.lt.s32.totalorder %s16, 1
          %s307 = scalar_select %p306, %s16, 1
          %s308 = smul.addr %s307, 2
          %s309 = smul.addr %s308, 4
          %s310 = scalar_lea.vmem %s0, %s309
        $region56: #{_lambda_.1} parent=51 // pred_fallthru
          _
      $region52: #{_lambda_.1} parent=5 // pred_fallthru
        _
      %p311 = scmp.le.s32.totalorder 1, %s16
      %p312 = scmp.lt.s32.totalorder %s16, 3
      %p313 = pnand %p311, %p312
      %p314 = pneg %p313
      // Predicated region
      $region57: #{_lambda_.1} parent=5 // pred_check
        _
      $region58: #{_lambda_.1} parent=5 // pred_check_branch
        %316 = sbr.rel (%p313) target = $region60
      $region59: #{_lambda_.1} parent=5 // pred_region
        %s317 = ssub.s32 %s16, 1
        %p318 = scmp.lt.s32.totalorder %s21, 1
        %s319 = scalar_select %p318, %s21, 1
        %s320 = smul.addr %s319, 2
        %s321 = smul.addr %s320, 4
        %s322 = scalar_lea.vmem %s0, %s321
        %p323 = pneg %p42
        %p324 = pneg %p39
        %p325 = pneg %p63
        %p326 = pneg %p60
        %p327 = pneg %p84
        %p328 = pneg %p81
        %p329 = pneg %p105
        %p330 = pneg %p102
        %p331 = pneg %p126
        %p332 = pneg %p123
        %p333 = pneg %p147
        %p334 = pneg %p144
        %p335 = pneg %p168
        %p336 = pneg %p165
        %p337 = pneg %p189
        %p338 = pneg %p186
        %p339 = pneg %p210
        %p340 = pneg %p207
        %p341 = pneg %p231
        %p342 = pneg %p228
        %p343 = pneg %p257
        %p344 = pneg %p254
        %s345 = sand.u32 %s244, 1
        %s346 = sand.u32 %s244, 1
        %s347 = smul.addr %s346, 64
        %s348 = scalar_lea.vmem [#allocation2], %s347
        %p349 = scmp.lt.s32.totalorder %s21, 1
        %s350 = scalar_select %p349, %s21, 1
        %s351 = smul.addr %s350, 2
        %s352 = smul.addr %s351, 4
        %s353 = scalar_lea.vmem %s0, %s352
        %s354 = smul.u32 2, %s21
        %v356 = vld [vmem:[%s353] sm:$0x77]
        %v357 = vld [vmem:[%s1] sm:$0x7]
        %359 = vset.pattern.permute.xlu0 0
        %360 = vperm.xlu0 %359, %v357
        %v361 = vpop.permute.xlu0 %360
        %v363 = vunpack.c.l.s4 839922192
        %v364 = vunpack.c.0.s8 %v363
        %v365 = vlaneseq
        %v366 = vshrl.u32 %v365, 7
        %v367 = vsub.s32 %v364, %v366
        %v368 = vrot.slane %v361, %v367
        %v370 = vsub.f32 %v356, %v368
        %v372 = vcombine.high %v370, %v370
        %373 = vrot.lane.b32.xlu0 %v372, 17
        %v374 = vpop.permute.xlu0 %373
        %376 = vrot.lane.b32.xlu0 %v370, 17
        %v377 = vpop.permute.xlu0 %376
        %vm378 = vcmask 138240
        %v379 = vsel %vm378, %v377, %v374
        %v382 = vsel %vm378, %v374, %v377
        %v383 = vld [vmem:[%s6] ss:$8 sm:$0x3]
        %v385 = vlaneseq
        %v386 = vshrl.u32 %v385, 7
        %v387 = vsub.s32 0, %v386
        %v388 = vrot.slane %v383, %v387
        %v389 = vlaneseq
        %v390 = vshrl.u32 %v389, 7
        %v391 = vsub.s32 1, %v390
        %v392 = vrot.slane %v383, %v391
        %v395 = vmul.f32 %v382, %v388
        %v396 = vmul.f32 %v379, %v392
        %397 = vrot.lane.b32.xlu0 %v372, 16
        %v398 = vpop.permute.xlu0 %397
        %400 = vrot.lane.b32.xlu0 %v370, 16
        %v401 = vpop.permute.xlu0 %400
        %vm402 = vcmask 130048
        %v403 = vsel %vm402, %v401, %v398
        %v406 = vsel %vm402, %v398, %v401
        %s407 = scalar_lea.vmem %s6, 1
        %v408 = vld [vmem:[%s407] ss:$8 sm:$0x3]
        %v410 = vlaneseq
        %v411 = vshrl.u32 %v410, 7
        %v412 = vsub.s32 0, %v411
        %v413 = vrot.slane %v408, %v412
        %v414 = vlaneseq
        %v415 = vshrl.u32 %v414, 7
        %v416 = vsub.s32 1, %v415
        %v417 = vrot.slane %v408, %v416
        %v420 = vmul.f32 %v406, %v413
        %v421 = vmul.f32 %v403, %v417
        %422 = vrot.lane.b32.xlu0 %v372, 15
        %v423 = vpop.permute.xlu0 %422
        %425 = vrot.lane.b32.xlu0 %v370, 15
        %v426 = vpop.permute.xlu0 %425
        %vm427 = vcmask 121856
        %v428 = vsel %vm427, %v426, %v423
        %v431 = vsel %vm427, %v423, %v426
        %s432 = scalar_lea.vmem %s6, 2
        %v433 = vld [vmem:[%s432] ss:$8 sm:$0x3]
        %v435 = vlaneseq
        %v436 = vshrl.u32 %v435, 7
        %v437 = vsub.s32 0, %v436
        %v438 = vrot.slane %v433, %v437
        %v439 = vlaneseq
        %v440 = vshrl.u32 %v439, 7
        %v441 = vsub.s32 1, %v440
        %v442 = vrot.slane %v433, %v441
        %v445 = vmul.f32 %v431, %v438
        %v446 = vmul.f32 %v428, %v442
        %447 = vrot.lane.b32.xlu0 %v372, 1
        %v448 = vpop.permute.xlu0 %447
        %450 = vrot.lane.b32.xlu0 %v370, 1
        %v451 = vpop.permute.xlu0 %450
        %vm452 = vcmask 7168
        %v453 = vsel %vm452, %v451, %v448
        %v456 = vsel %vm452, %v448, %v451
        %s457 = scalar_lea.vmem %s6, 3
        %v458 = vld [vmem:[%s457] ss:$8 sm:$0x3]
        %v460 = vlaneseq
        %v461 = vshrl.u32 %v460, 7
        %v462 = vsub.s32 0, %v461
        %v463 = vrot.slane %v458, %v462
        %v464 = vlaneseq
        %v465 = vshrl.u32 %v464, 7
        %v466 = vsub.s32 1, %v465
        %v467 = vrot.slane %v458, %v466
        %v470 = vmul.f32 %v456, %v463
        %v471 = vmul.f32 %v453, %v467
        %s472 = scalar_lea.vmem %s6, 4
        %v473 = vld [vmem:[%s472] ss:$8 sm:$0x3]
        %v475 = vlaneseq
        %v476 = vshrl.u32 %v475, 7
        %v477 = vsub.s32 0, %v476
        %v478 = vrot.slane %v473, %v477
        %v479 = vlaneseq
        %v480 = vshrl.u32 %v479, 7
        %v481 = vsub.s32 1, %v480
        %v482 = vrot.slane %v473, %v481
        %v483 = vcombine.low %v478, %v482
        %v485 = vmul.f32 %v370, %v483
        %486 = vrot.lane.b32.xlu0 %v370, 127
        %v487 = vpop.permute.xlu0 %486
        %488 = vrot.lane.b32.xlu0 %v372, 127
        %v489 = vpop.permute.xlu0 %488
        %vm490 = vcmask 1039360
        %v491 = vsel %vm490, %v487, %v489
        %v495 = vsel %vm490, %v489, %v487
        %s496 = scalar_lea.vmem %s6, 5
        %v497 = vld [vmem:[%s496] ss:$8 sm:$0x3]
        %v499 = vlaneseq
        %v500 = vshrl.u32 %v499, 7
        %v501 = vsub.s32 0, %v500
        %v502 = vrot.slane %v497, %v501
        %v503 = vlaneseq
        %v504 = vshrl.u32 %v503, 7
        %v505 = vsub.s32 1, %v504
        %v506 = vrot.slane %v497, %v505
        %v509 = vmul.f32 %v491, %v502
        %v510 = vmul.f32 %v495, %v506
        %511 = vrot.lane.b32.xlu0 %v370, 113
        %v512 = vpop.permute.xlu0 %511
        %513 = vrot.lane.b32.xlu0 %v372, 113
        %v514 = vpop.permute.xlu0 %513
        %vm515 = vcmask 924672
        %v516 = vsel %vm515, %v512, %v514
        %v520 = vsel %vm515, %v514, %v512
        %s521 = scalar_lea.vmem %s6, 6
        %v522 = vld [vmem:[%s521] ss:$8 sm:$0x3]
        %v524 = vlaneseq
        %v525 = vshrl.u32 %v524, 7
        %v526 = vsub.s32 0, %v525
        %v527 = vrot.slane %v522, %v526
        %v528 = vlaneseq
        %v529 = vshrl.u32 %v528, 7
        %v530 = vsub.s32 1, %v529
        %v531 = vrot.slane %v522, %v530
        %v534 = vmul.f32 %v516, %v527
        %v535 = vmul.f32 %v520, %v531
        %536 = vrot.lane.b32.xlu0 %v370, 112
        %v537 = vpop.permute.xlu0 %536
        %538 = vrot.lane.b32.xlu0 %v372, 112
        %v539 = vpop.permute.xlu0 %538
        %vm540 = vcmask 916480
        %v541 = vsel %vm540, %v537, %v539
        %v545 = vsel %vm540, %v539, %v537
        %s546 = scalar_lea.vmem %s6, 7
        %v547 = vld [vmem:[%s546] ss:$8 sm:$0x3]
        %v549 = vlaneseq
        %v550 = vshrl.u32 %v549, 7
        %v551 = vsub.s32 0, %v550
        %v552 = vrot.slane %v547, %v551
        %v553 = vlaneseq
        %v554 = vshrl.u32 %v553, 7
        %v555 = vsub.s32 1, %v554
        %v556 = vrot.slane %v547, %v555
        %v559 = vmul.f32 %v541, %v552
        %v560 = vmul.f32 %v545, %v556
        %561 = vrot.lane.b32.xlu0 %v370, 111
        %v562 = vpop.permute.xlu0 %561
        %563 = vrot.lane.b32.xlu0 %v372, 111
        %v564 = vpop.permute.xlu0 %563
        %vm565 = vcmask 908288
        %v566 = vsel %vm565, %v562, %v564
        %v570 = vsel %vm565, %v564, %v562
        %s571 = scalar_lea.vmem %s6, 16
        %v572 = vld [vmem:[%s571] ss:$8 sm:$0x3]
        %v574 = vlaneseq
        %v575 = vshrl.u32 %v574, 7
        %v576 = vsub.s32 0, %v575
        %v577 = vrot.slane %v572, %v576
        %v578 = vlaneseq
        %v579 = vshrl.u32 %v578, 7
        %v580 = vsub.s32 1, %v579
        %v581 = vrot.slane %v572, %v580
        %v584 = vmul.f32 %v566, %v577
        %v585 = vmul.f32 %v570, %v581
        %v588 = vrot.slane %v420, 5
        %v589 = vrot.slane %v421, 5
        %v594 = vrot.slane %v445, 2
        %v595 = vrot.slane %v446, 2
        %v600 = vrot.slane %v470, 7
        %v601 = vrot.slane %v471, 7
        %v605 = vcombine.low %v485, %v485
        %v609 = vrot.slane %v509, 1
        %v610 = vrot.slane %v510, 1
        %v615 = vrot.slane %v534, 6
        %v616 = vrot.slane %v535, 6
        %v621 = vrot.slane %v559, 3
        %v622 = vrot.slane %v560, 3
        %vm625 = vcmask 1042432
        %v626 = vsel %vm625, %v395, %v588
        %v627 = vsel %vm625, %v396, %v589
        %vm628 = vcmask 1045504
        %v629 = vsel %vm628, %v626, %v594
        %v630 = vsel %vm628, %v627, %v595
        %vm631 = vcmask 1040384
        %v632 = vsel %vm631, %v594, %v600
        %v633 = vsel %vm631, %v595, %v601
        %vm634 = vcmask 1043456
        %v635 = vsel %vm634, %v632, %v605
        %v636 = vsel %vm634, %v633, %v485
        %vm637 = vcmask 1046528
        %v638 = vsel %vm637, %v635, %v609
        %v639 = vsel %vm637, %v636, %v610
        %vm640 = vcmask 1041408
        %v641 = vsel %vm640, %v609, %v615
        %v642 = vsel %vm640, %v610, %v616
        %vm643 = vcmask 1044480
        %v644 = vsel %vm643, %v641, %v621
        %v645 = vsel %vm643, %v642, %v622
        %v646 = vsel %vm625, %v584, 0.0
        %v647 = vsel %vm625, %v585, 0.0
        %v648 = vpack.c.bf16 %v638, %v629
        %v649 = vpack.c.bf16 %v639, %v630
        %v650 = vpack.c.bf16 %v646, %v644
        %v651 = vpack.c.bf16 %v647, %v645
        %v652 = vld [vmem:[%s2] sm:$0xf]
        %v653 = vld [vmem:[%s2 + $0x4] sm:$0xf]
        %v654 = vld [vmem:[%s2 + $0x8] sm:$0xf]
        %v655 = vld [vmem:[%s2 + $0xc] sm:$0xf]
        %v656 = vld [vmem:[%s3] sm:$0xff]
        %v657 = vld [vmem:[%s3 + $0x8] sm:$0xff]
        %v658 = vld [vmem:[%s3 + $0x10] sm:$0xff]
        %v659 = vld [vmem:[%s3 + $0x18] sm:$0xff]
        %661 = vset.pattern.permute.xlu0 0
        %662 = vperm.xlu0 %661, %v656
        %v663 = vpop.permute.xlu0 %662
        %666 = vset.pattern.permute.xlu0 0
        %667 = vperm.xlu0 %666, %v657
        %v668 = vpop.permute.xlu0 %667
        %671 = vset.pattern.permute.xlu0 0
        %672 = vperm.xlu0 %671, %v658
        %v673 = vpop.permute.xlu0 %672
        %676 = vset.pattern.permute.xlu0 0
        %677 = vperm.xlu0 %676, %v659
        %v678 = vpop.permute.xlu0 %677
        %v684 = vunpack.c.l.b16 %v652
        %v685 = vunpack.c.l.b16 %v653
        %v686 = vunpack.c.l.b16 %v654
        %v687 = vunpack.c.l.b16 %v655
        %v688 = vpack.c.b16 %v685, %v684
        %v689 = vpack.c.b16 %v687, %v686
        %vm690 = vcmask 261120
        %v692 = vsel %vm690, %v688, 0
        %v695 = vsel %vm690, %v689, 0
        %697 = vmatprep.subr.bf16.mxu0 %v649
        %698 = vmatpush1.bf16.msra.mxu0 %v648
        %699 = vmatprep.subr.bf16.mxu0 %v651
        %700 = vmatpush1.bf16.msra.mxu0 %v650
        %701 = vmatprep.subr.bf16.mxu0 0
        %702 = vmatpush1.bf16.msra.mxu0 0
        %703 = vmatprep.subr.bf16.mxu0 0
        %704 = vmatpush1.bf16.msra.mxu0 0
        %705 = vmatprep.subr.bf16.mxu0 0
        %706 = vmatpush1.bf16.msra.mxu0 0
        %707 = vmatprep.subr.bf16.mxu0 0
        %708 = vmatpush1.bf16.msra.mxu0 0
        %709 = vmatprep.subr.bf16.mxu0 0
        %710 = vmatpush1.bf16.msra.mxu0 0
        %711 = vmatprep.subr.bf16.mxu0 0
        %712 = vmatpush1.bf16.msra.mxu0 0
        %713 = vmatprep.subr.bf16.mxu0 0
        %714 = vmatpush1.bf16.msra.mxu0 0
        %715 = vmatprep.subr.bf16.mxu0 0
        %716 = vmatpush1.bf16.msra.mxu0 0
        %717 = vmatprep.subr.bf16.mxu0 0
        %718 = vmatpush1.bf16.msra.mxu0 0
        %719 = vmatprep.subr.bf16.mxu0 0
        %720 = vmatpush1.bf16.msra.mxu0 0
        %721 = vmatprep.subr.bf16.mxu0 0
        %722 = vmatpush1.bf16.msra.mxu0 0
        %723 = vmatprep.subr.bf16.mxu0 0
        %724 = vmatpush1.bf16.msra.mxu0 0
        %725 = vmatprep.subr.bf16.mxu0 0
        %726 = vmatpush1.bf16.msra.mxu0 0
        %727 = vmatprep.subr.bf16.mxu0 0
        %728 = vmatpush1.bf16.msra.mxu0 0
        %729 = vmatprep.mubr.bf16.mxu0 0
        %730 = vmatmul.mubr.bf16.gmra.mrb[0].mxu0 %v692
        %v731 = vpop.f32.mrb[0].mxu0
        %v732 = vadd.f32 %v663, %v731
        %v733 = vpop.f32.mrb[0].mxu0
        %v734 = vadd.f32 %v663, %v733
        %v735 = vpop.f32.mrb[0].mxu0
        %v736 = vadd.f32 %v668, %v735
        %v737 = vpop.f32.mrb[0].mxu0
        %v738 = vadd.f32 %v668, %v737
        %739 = vmatprep.mubr.bf16.mxu0 0
        %740 = vmatmul.mubr.bf16.gmra.mrb[0].mxu0 %v695
        %v741 = vpop.f32.mrb[0].mxu0
        %v742 = vadd.f32 %v673, %v741
        %v743 = vpop.f32.mrb[0].mxu0
        %v744 = vadd.f32 %v673, %v743
        %v745 = vpop.f32.mrb[0].mxu0
        %v746 = vadd.f32 %v678, %v745
        %v747 = vpop.f32.mrb[0].mxu0
        %v748 = vadd.f32 %v678, %v747
        %749 = vdwg.mxu0
        %v750 = vmax.f32 %v732, 0.0
        %v751 = vmax.f32 %v734, 0.0
        %v752 = vmax.f32 %v736, 0.0
        %v753 = vmax.f32 %v738, 0.0
        %v754 = vmax.f32 %v742, 0.0
        %v755 = vmax.f32 %v744, 0.0
        %v756 = vmax.f32 %v746, 0.0
        %v757 = vmax.f32 %v748, 0.0
        %v758 = vld [vmem:[%s4] sm:$0xf]
        %v759 = vld [vmem:[%s4 + $0x4] sm:$0xf]
        %v760 = vld [vmem:[%s4 + $0x8] sm:$0xf]
        %v761 = vld [vmem:[%s4 + $0xc] sm:$0xf]
        %v762 = vpack.c.bf16 %v752, %v750
        %v763 = vpack.c.bf16 %v753, %v751
        %v764 = vpack.c.bf16 %v756, %v754
        %v765 = vpack.c.bf16 %v757, %v755
        %v766 = vld [vmem:[%s5] sm:$0xff]
        %v767 = vld [vmem:[%s5 + $0x8] sm:$0xff]
        %v768 = vld [vmem:[%s5 + $0x10] sm:$0xff]
        %v769 = vld [vmem:[%s5 + $0x18] sm:$0xff]
        %771 = vset.pattern.permute.xlu0 0
        %772 = vperm.xlu0 %771, %v766
        %v773 = vpop.permute.xlu0 %772
        %776 = vset.pattern.permute.xlu0 0
        %777 = vperm.xlu0 %776, %v767
        %v778 = vpop.permute.xlu0 %777
        %781 = vset.pattern.permute.xlu0 0
        %782 = vperm.xlu0 %781, %v768
        %v783 = vpop.permute.xlu0 %782
        %786 = vset.pattern.permute.xlu0 0
        %787 = vperm.xlu0 %786, %v769
        %v788 = vpop.permute.xlu0 %787
        %v794 = vunpack.c.l.b16 %v758
        %v795 = vunpack.c.l.b16 %v759
        %v796 = vunpack.c.l.b16 %v760
        %v797 = vunpack.c.l.b16 %v761
        %v798 = vpack.c.b16 %v795, %v794
        %v799 = vpack.c.b16 %v797, %v796
        %v801 = vsel %vm690, %v798, 0
        %v804 = vsel %vm690, %v799, 0
        %806 = vmatprep.subr.bf16.mxu0 %v763
        %807 = vmatpush1.bf16.msra.mxu0 %v762
        %808 = vmatprep.subr.bf16.mxu0 %v765
        %809 = vmatpush1.bf16.msra.mxu0 %v764
        %810 = vmatprep.subr.bf16.mxu0 0
        %811 = vmatpush1.bf16.msra.mxu0 0
        %812 = vmatprep.subr.bf16.mxu0 0
        %813 = vmatpush1.bf16.msra.mxu0 0
        %814 = vmatprep.subr.bf16.mxu0 0
        %815 = vmatpush1.bf16.msra.mxu0 0
        %816 = vmatprep.subr.bf16.mxu0 0
        %817 = vmatpush1.bf16.msra.mxu0 0
        %818 = vmatprep.subr.bf16.mxu0 0
        %819 = vmatpush1.bf16.msra.mxu0 0
        %820 = vmatprep.subr.bf16.mxu0 0
        %821 = vmatpush1.bf16.msra.mxu0 0
        %822 = vmatprep.subr.bf16.mxu0 0
        %823 = vmatpush1.bf16.msra.mxu0 0
        %824 = vmatprep.subr.bf16.mxu0 0
        %825 = vmatpush1.bf16.msra.mxu0 0
        %826 = vmatprep.subr.bf16.mxu0 0
        %827 = vmatpush1.bf16.msra.mxu0 0
        %828 = vmatprep.subr.bf16.mxu0 0
        %829 = vmatpush1.bf16.msra.mxu0 0
        %830 = vmatprep.subr.bf16.mxu0 0
        %831 = vmatpush1.bf16.msra.mxu0 0
        %832 = vmatprep.subr.bf16.mxu0 0
        %833 = vmatpush1.bf16.msra.mxu0 0
        %834 = vmatprep.subr.bf16.mxu0 0
        %835 = vmatpush1.bf16.msra.mxu0 0
        %836 = vmatprep.subr.bf16.mxu0 0
        %837 = vmatpush1.bf16.msra.mxu0 0
        %838 = vmatprep.mubr.bf16.mxu0 0
        %839 = vmatmul.mubr.bf16.gmra.mrb[0].mxu0 %v801
        %v840 = vpop.f32.mrb[0].mxu0
        %v841 = vadd.f32 %v773, %v840
        %v842 = vpop.f32.mrb[0].mxu0
        %v843 = vadd.f32 %v773, %v842
        %v844 = vpop.f32.mrb[0].mxu0
        %v845 = vadd.f32 %v778, %v844
        %v846 = vpop.f32.mrb[0].mxu0
        %v847 = vadd.f32 %v778, %v846
        %848 = vmatprep.mubr.bf16.mxu0 0
        %849 = vmatmul.mubr.bf16.gmra.mrb[0].mxu0 %v804
        %v850 = vpop.f32.mrb[0].mxu0
        %v851 = vadd.f32 %v783, %v850
        %v852 = vpop.f32.mrb[0].mxu0
        %v853 = vadd.f32 %v783, %v852
        %v854 = vpop.f32.mrb[0].mxu0
        %v855 = vadd.f32 %v788, %v854
        %v856 = vpop.f32.mrb[0].mxu0
        %v857 = vadd.f32 %v788, %v856
        %858 = vdwg.mxu0
        %v861 = vrot.slane %v841, 1
        %v862 = vrot.slane %v843, 1
        %v865 = vsub.f32 %v841, %v861
        %v866 = vsub.f32 %v843, %v862
        %v867 = vmul.f32 %v865, 1.442695
        %v868 = vpow.pop %v867
        %v869 = vmul.f32 %v866, 1.442695
        %v870 = vpow.pop %v869
        %v871 = vadd.f32 %v868, 1.0
        %v872 = vadd.f32 %v870, 1.0
        %v873 = vrcp.pop %v871
        %v874 = vmul.f32 1.0, %v873
        %v875 = vrcp.pop %v872
        %v876 = vmul.f32 1.0, %v875
        %v879 = vcombine.low %v874, %v876
        %v881 = vunpack.c.l.s4 1966171168
        %v882 = vunpack.c.0.s8 %v881
        %v883 = vlaneseq
        %v884 = vshrl.u32 %v883, 7
        %v885 = vsub.s32 %v882, %v884
        %v886 = vrot.slane %v879, %v885
        %v888 = vunpack.c.l.s4 1966171168
        %v889 = vunpack.c.0.s8 %v888
        %v890 = vlaneseq
        %v891 = vshrl.u32 %v890, 7
        %v892 = vsub.s32 %v889, %v891
        %v893 = vrot.slane %v886, %v892
        %v895 = vlaneseq
        %vm896 = vcmp.ge.s32.totalorder %v895, 0
        %vm897 = vcmp.lt.s32.totalorder %v895, 256
        %vm898 = vmand %vm896, %vm897
        %899 = vst.msk [vmem:[%s348] ss:$8 sm:$0x3] %vm898, %v893
        %900 = vst.msk [vmem:[%s348] ss:$8 sm:$0x0] %vm898, %v893
        %v901 = vld [vmem:[%s7] sm:$0x3]
        %v902 = vld [vmem:[%s7 + $0x8] sm:$0x3]
        %v903 = vld [vmem:[%s7] sm:$0xc]
        %v904 = vld [vmem:[%s7 + $0x8] sm:$0xc]
        %v905 = vmul.f32 %v903, 0.1
        %v906 = vmul.f32 %v904, 0.1
        %v907 = vmul.f32 %v841, %v905
        %v908 = vmul.f32 %v843, %v906
        %v911 = vrot.slane %v907, 2
        %v912 = vrot.slane %v908, 2
        %v915 = vadd.f32 %v901, %v911
        %v916 = vadd.f32 %v902, %v912
        %v917 = vmul.f32 %v841, 0.2
        %v918 = vmul.f32 %v843, 0.2
        %v919 = vmul.f32 %v917, 1.442695
        %v920 = vpow.pop %v919
        %v921 = vmul.f32 %v918, 1.442695
        %v922 = vpow.pop %v921
        %v925 = vrot.slane %v920, 2
        %v926 = vrot.slane %v922, 2
        %v929 = vmul.f32 %v903, %v925
        %v930 = vmul.f32 %v904, %v926
        %v931 = vmul.f32 %v929, 0.5
        %v932 = vmul.f32 %v930, 0.5
        %v935 = vrot.slane %v931, 2
        %v936 = vrot.slane %v932, 2
        %v939 = vsub.f32 %v915, %v935
        %v940 = vsub.f32 %v916, %v936
        %v941 = vmax.f32 %v939, 0.0
        %v942 = vmax.f32 %v940, 0.0
        %v943 = vmin.f32 %v941, 1.0
        %v944 = vmin.f32 %v942, 1.0
        %v947 = vrot.slane %v943, 7
        %v948 = vrot.slane %v944, 7
        %951 = vst [vmem:[%s348] sm:$0x6] %v947
        %952 = vst [vmem:[%s348 + $0x8] sm:$0x6] %v948
        %v953 = vadd.f32 %v915, %v935
        %v954 = vadd.f32 %v916, %v936
        %v955 = vmax.f32 %v953, 0.0
        %v956 = vmax.f32 %v954, 0.0
        %v957 = vmin.f32 %v955, 1.0
        %v958 = vmin.f32 %v956, 1.0
        %v961 = vrot.slane %v957, 5
        %v962 = vrot.slane %v958, 5
        %965 = vst [vmem:[%s348] sm:$0x18] %v961
        %966 = vst [vmem:[%s348 + $0x8] sm:$0x18] %v962
        %v967 = vld [vmem:[%s8] sm:$0xff]
        %v968 = vld [vmem:[%s8 + $0x8] sm:$0xff]
        %v969 = vld [vmem:[%s8 + $0x10] sm:$0x3]
        %v970 = vld [vmem:[%s8 + $0x18] sm:$0x3]
        %v971 = vld [vmem:[%s9] sm:$0xff]
        %v972 = vld [vmem:[%s9 + $0x8] sm:$0xff]
        %v973 = vld [vmem:[%s9 + $0x10] sm:$0x3]
        %v974 = vld [vmem:[%s9 + $0x18] sm:$0x3]
        %v979 = vrot.slane %v971, 2
        %v980 = vrot.slane %v972, 2
        %v981 = vrot.slane %v973, 2
        %v982 = vsel %vm628, %v979, %v981
        %v983 = vrot.slane %v974, 2
        %v984 = vsel %vm628, %v980, %v983
        %v989 = vmul.f32 %v841, %v979
        %v990 = vmul.f32 %v843, %v980
        %v991 = vmul.f32 %v845, %v982
        %v992 = vmul.f32 %v847, %v984
        %v997 = vrot.slane %v989, 6
        %v998 = vrot.slane %v991, 6
        %v999 = vsel %vm640, %v997, %v998
        %v1000 = vrot.slane %v990, 6
        %v1001 = vrot.slane %v992, 6
        %v1002 = vsel %vm640, %v1000, %v1001
        %v1007 = vadd.f32 %v967, %v999
        %v1008 = vadd.f32 %v968, %v1002
        %v1009 = vadd.f32 %v969, %v998
        %v1010 = vadd.f32 %v970, %v1001
        %v1015 = vrot.slane %v1007, 3
        %v1016 = vrot.slane %v1008, 3
        %v1017 = vrot.slane %v1009, 3
        %v1018 = vsel %vm643, %v1015, %v1017
        %v1019 = vrot.slane %v1010, 3
        %v1020 = vsel %vm643, %v1016, %v1019
        %1025 = vst [vmem:[%s348] sm:$0xe0] %v1015
        %1026 = vst [vmem:[%s348 + $0x8] sm:$0xe0] %v1016
        %1027 = vst [vmem:[%s348 + $0x10] sm:$0x7f] %v1018
        %1028 = vst [vmem:[%s348 + $0x18] sm:$0x7f] %v1020
        %s1029 = scalar_lea.vmem %s348, 23 [#allocation2]
        %1030 = vst.msk [vmem:[%s1029] ss:$8 sm:$0x3] %vm898, 0.0
        %1031 = vst.msk [vmem:[%s1029] ss:$8 sm:$0x0] %vm898, 0.0
        %v1034 = vrot.slane %v851, 1
        %v1035 = vrot.slane %v853, 1
        %v1038 = vsub.f32 %v851, %v1034
        %v1039 = vsub.f32 %v853, %v1035
        %v1040 = vmul.f32 %v1038, 1.442695
        %v1041 = vpow.pop %v1040
        %v1042 = vmul.f32 %v1039, 1.442695
        %v1043 = vpow.pop %v1042
        %v1044 = vadd.f32 %v1041, 1.0
        %v1045 = vadd.f32 %v1043, 1.0
        %v1046 = vrcp.pop %v1044
        %v1047 = vmul.f32 1.0, %v1046
        %v1048 = vrcp.pop %v1045
        %v1049 = vmul.f32 1.0, %v1048
        %v1052 = vcombine.low %v1047, %v1049
        %v1054 = vunpack.c.l.s4 1966171168
        %v1055 = vunpack.c.0.s8 %v1054
        %v1056 = vlaneseq
        %v1057 = vshrl.u32 %v1056, 7
        %v1058 = vsub.s32 %v1055, %v1057
        %v1059 = vrot.slane %v1052, %v1058
        %v1061 = vunpack.c.l.s4 1966171168
        %v1062 = vunpack.c.0.s8 %v1061
        %v1063 = vlaneseq
        %v1064 = vshrl.u32 %v1063, 7
        %v1065 = vsub.s32 %v1062, %v1064
        %v1066 = vrot.slane %v1059, %v1065
        %s1068 = scalar_lea.vmem %s348, 32 [#allocation2]
        %1069 = vst.msk [vmem:[%s1068] ss:$8 sm:$0x3] %vm898, %v1066
        %1070 = vst.msk [vmem:[%s1068] ss:$8 sm:$0x0] %vm898, %v1066
        %v1071 = vld [vmem:[%s7] sm:$0x30]
        %v1072 = vld [vmem:[%s7 + $0x8] sm:$0x30]
        %v1073 = vld [vmem:[%s7] sm:$0xc0]
        %v1074 = vld [vmem:[%s7 + $0x8] sm:$0xc0]
        %v1075 = vmul.f32 %v1073, 0.1
        %v1076 = vmul.f32 %v1074, 0.1
        %v1079 = vrot.slane %v1075, 4
        %v1080 = vrot.slane %v1076, 4
        %v1083 = vmul.f32 %v851, %v1079
        %v1084 = vmul.f32 %v853, %v1080
        %v1087 = vrot.slane %v1083, 6
        %v1088 = vrot.slane %v1084, 6
        %v1091 = vadd.f32 %v1071, %v1087
        %v1092 = vadd.f32 %v1072, %v1088
        %v1093 = vmul.f32 %v851, 0.2
        %v1094 = vmul.f32 %v853, 0.2
        %v1095 = vmul.f32 %v1093, 1.442695
        %v1096 = vpow.pop %v1095
        %v1097 = vmul.f32 %v1094, 1.442695
        %v1098 = vpow.pop %v1097
        %v1101 = vrot.slane %v1096, 6
        %v1102 = vrot.slane %v1098, 6
        %v1105 = vmul.f32 %v1073, %v1101
        %v1106 = vmul.f32 %v1074, %v1102
        %v1107 = vmul.f32 %v1105, 0.5
        %v1108 = vmul.f32 %v1106, 0.5
        %v1111 = vrot.slane %v1107, 2
        %v1112 = vrot.slane %v1108, 2
        %v1115 = vsub.f32 %v1091, %v1111
        %v1116 = vsub.f32 %v1092, %v1112
        %v1117 = vmax.f32 %v1115, 0.0
        %v1118 = vmax.f32 %v1116, 0.0
        %v1119 = vmin.f32 %v1117, 1.0
        %v1120 = vmin.f32 %v1118, 1.0
        %v1123 = vrot.slane %v1119, 3
        %v1124 = vrot.slane %v1120, 3
        %1127 = vst [vmem:[%s348 + $0x20] sm:$0x6] %v1123
        %1128 = vst [vmem:[%s348 + $0x28] sm:$0x6] %v1124
        %v1129 = vadd.f32 %v1091, %v1111
        %v1130 = vadd.f32 %v1092, %v1112
        %v1131 = vmax.f32 %v1129, 0.0
        %v1132 = vmax.f32 %v1130, 0.0
        %v1133 = vmin.f32 %v1131, 1.0
        %v1134 = vmin.f32 %v1132, 1.0
        %v1137 = vrot.slane %v1133, 1
        %v1138 = vrot.slane %v1134, 1
        %1141 = vst [vmem:[%s348 + $0x20] sm:$0x18] %v1137
        %1142 = vst [vmem:[%s348 + $0x28] sm:$0x18] %v1138
        %v1143 = vld [vmem:[%s8 + $0x10] sm:$0xfc]
        %v1144 = vld [vmem:[%s8 + $0x18] sm:$0xfc]
        %v1145 = vld [vmem:[%s8 + $0x20] sm:$0xf]
        %v1146 = vld [vmem:[%s8 + $0x28] sm:$0xf]
        %v1147 = vld [vmem:[%s9 + $0x10] sm:$0xfc]
        %v1148 = vld [vmem:[%s9 + $0x18] sm:$0xfc]
        %v1149 = vld [vmem:[%s9 + $0x20] sm:$0xf]
        %v1150 = vld [vmem:[%s9 + $0x28] sm:$0xf]
        %v1155 = vrot.slane %v1147, 4
        %v1156 = vrot.slane %v1148, 4
        %v1157 = vrot.slane %v1149, 4
        %v1158 = vsel %vm634, %v1155, %v1157
        %v1159 = vrot.slane %v1150, 4
        %v1160 = vsel %vm634, %v1156, %v1159
        %v1165 = vmul.f32 %v851, %v1155
        %v1166 = vmul.f32 %v853, %v1156
        %v1167 = vmul.f32 %v855, %v1158
        %v1168 = vmul.f32 %v857, %v1160
        %v1173 = vrot.slane %v1165, 4
        %v1174 = vrot.slane %v1167, 4
        %v1175 = vsel %vm634, %v1173, %v1174
        %v1176 = vrot.slane %v1166, 4
        %v1177 = vrot.slane %v1168, 4
        %v1178 = vsel %vm634, %v1176, %v1177
        %v1183 = vadd.f32 %v1143, %v1175
        %v1184 = vadd.f32 %v1144, %v1178
        %v1185 = vadd.f32 %v1145, %v1174
        %v1186 = vadd.f32 %v1146, %v1177
        %v1191 = vrot.slane %v1183, 5
        %v1192 = vrot.slane %v1184, 5
        %v1193 = vrot.slane %v1185, 5
        %v1194 = vsel %vm625, %v1191, %v1193
        %v1195 = vrot.slane %v1186, 5
        %v1196 = vsel %vm625, %v1192, %v1195
        %1201 = vst [vmem:[%s348 + $0x20] sm:$0xe0] %v1191
        %1202 = vst [vmem:[%s348 + $0x28] sm:$0xe0] %v1192
        %1203 = vst [vmem:[%s348 + $0x30] sm:$0x7f] %v1194
        %1204 = vst [vmem:[%s348 + $0x38] sm:$0x7f] %v1196
        %s1205 = scalar_lea.vmem %s348, 55 [#allocation2]
        %1206 = vst.msk [vmem:[%s1205] ss:$8 sm:$0x3] %vm898, 0.0
        %1207 = vst.msk [vmem:[%s1205] ss:$8 sm:$0x0] %vm898, 0.0
        %s1208 = sand.u32 %s244, 1
        %s1209 = sand.u32 %s244, 1
        %s1210 = smul.addr %s1209, 64
        %s1211 = scalar_lea.vmem [#allocation2], %s1210
        // Predicated region
        $region61: #{_lambda_.1} parent=59 // pred_check
          %p1212 = pneg %p254
        $region62: #{_lambda_.1} parent=59 // pred_check_branch
          %1214 = sbr.rel (%p1212) target = $region64
        $region63: #{_lambda_.1} parent=59 // pred_region
          %s1215 = smul.u32 2, %s21
          %s1216 = smul.addr %s1215, 8
          %s1217 = scalar_lea.vmem %s10, %s1216
          // Predicated region
          $region65: #{_lambda_.1} parent=63 // pred_check
            _
          $region66: #{_lambda_.1} parent=63 // pred_check_branch
            %1219 = sbr.rel (0) target = $region68
          $region67: #{_lambda_.1} parent=63 // pred_region
            // Predicated region
            $region69: #{_lambda_.1} parent=67 // pred_check
              _
            $region70: #{_lambda_.1} parent=67 // pred_check_branch
              %1221 = sbr.rel (0) target = $region72
            $region71: #{_lambda_.1} parent=67 // pred_region
              loop: start=0, step=1, limit=1
              $region73: #{_lambda_.1} parent=71 // loop_pre_header
                _
              $region74: #{_lambda_.1} parent=71 // loop_header
                %s1223 = sphi 0, %s1227
                %p1224 = scmp.ge.s32.totalorder %s1223, 1
                %s1228 = sphi %s1211, %s1211
                %s1229 = sphi %s1217, %s1217
              $region75: #{_lambda_.1} parent=71 // loop_header_branch
                %1226 = sbr.rel (%p1224) target = $region79
              $region76: #{_lambda_.1} parent=71 // loop_body
                %v1230 = vld [vmem:[%s1228] sm:$0xff]
                %1231 = vst [vmem:[%s1229] sm:$0xff] %v1230
                %v1232 = vld [vmem:[%s1228 + $0x8] sm:$0xff]
                %1233 = vst [vmem:[%s1229 + $0x8] sm:$0xff] %v1232
                %v1234 = vld [vmem:[%s1228 + $0x10] sm:$0xff]
                %1235 = vst [vmem:[%s1229 + $0x20] sm:$0xff] %v1234
                %v1236 = vld [vmem:[%s1228 + $0x18] sm:$0xff]
                %1237 = vst [vmem:[%s1229 + $0x28] sm:$0xff] %v1236
                %v1238 = vld [vmem:[%s1228 + $0x20] sm:$0xff]
                %1239 = vst [vmem:[%s1229 + $0x40] sm:$0xff] %v1238
                %v1240 = vld [vmem:[%s1228 + $0x28] sm:$0xff]
                %1241 = vst [vmem:[%s1229 + $0x48] sm:$0xff] %v1240
                %v1242 = vld [vmem:[%s1228 + $0x30] sm:$0xff]
                %1243 = vst [vmem:[%s1229 + $0x60] sm:$0xff] %v1242
                %v1244 = vld [vmem:[%s1228 + $0x38] sm:$0xff]
                %1245 = vst [vmem:[%s1229 + $0x68] sm:$0xff] %v1244
              $region77: #{_lambda_.1} parent=71 // loop_footer
                %s1227 = sadd.s32 1, %s1223
              $region78: #{_lambda_.1} parent=71 // loop_footer_branch
                %1222 = sbr.rel target = $region74
              $region79: #{_lambda_.1} parent=71 // loop_exit
                _
            $region72: #{_lambda_.1} parent=67 // pred_fallthru
              _
            // Predicated region
            $region80: #{_lambda_.1} parent=67 // pred_check
              _
            $region81: #{_lambda_.1} parent=67 // pred_check_branch
              %1247 = sbr.rel target = $region83
            $region82: #{_lambda_.1} parent=67 // pred_region
              _
            $region83: #{_lambda_.1} parent=67 // pred_fallthru
              _
          $region68: #{_lambda_.1} parent=63 // pred_fallthru
            _
          %1248 = vnop
        $region64: #{_lambda_.1} parent=59 // pred_fallthru
          _
      $region60: #{_lambda_.1} parent=5 // pred_fallthru
        _
      %p1249 = scmp.le.s32.totalorder 2, %s16
      // Predicated region
      $region84: #{_lambda_.1} parent=5 // pred_check
        %p1250 = pneg %p1249
      $region85: #{_lambda_.1} parent=5 // pred_check_branch
        %1252 = sbr.rel (%p1250) target = $region87
      $region86: #{_lambda_.1} parent=5 // pred_region
        %s1253 = ssub.s32 %s16, 2
        // Predicated region
        $region88: #{_lambda_.1} parent=86 // pred_check
          %p1254 = pneg %p260
        $region89: #{_lambda_.1} parent=86 // pred_check_branch
          %1256 = sbr.rel (%p1254) target = $region91
        $region90: #{_lambda_.1} parent=86 // pred_region
          %s1257 = sand.u32 %s245, 1
          %s1258 = sand.u32 %s245, 1
          %s1259 = smul.addr %s1258, 64
          %s1260 = scalar_lea.vmem [#allocation2], %s1259
        $region91: #{_lambda_.1} parent=86 // pred_fallthru
          _
      $region87: #{_lambda_.1} parent=5 // pred_fallthru
        _
    $region6: #{_lambda_.1} parent=1 // loop_footer
      %s20 = sadd.s32 1, %s16
    $region7: #{_lambda_.1} parent=1 // loop_footer_branch
      %15 = sbr.rel target = $region3
    $region8: #{_lambda_.1} parent=1 // loop_exit
      _

</llo_original>
